<compile_context>
chip_gen: v5e
topology: v5e:2x2
jax: 0.10.0
libtpu: 0.0.40
codegen_flags: <defaults>
</compile_context>

<pallas_src>
import jax
import jax.numpy as jnp
from jax import lax
from jax.experimental import pallas as pl
from jax.experimental.pallas import tpu as pltpu


# ----------------------------------------------------------------------------
# BN folding helper (eval mode): y = scale * conv_out + bias
# ----------------------------------------------------------------------------
def _fold_bn(gamma, beta, mean, var, conv_bias, eps=1e-5):
    scale = gamma / jnp.sqrt(var + eps)
    bias = scale * (conv_bias - mean) + beta
    return scale, bias


def _round_up(v, m):
    return ((v + m - 1) // m) * m


def _pick_row_tile(H, W, target_rows=128):
    """Largest divisor TH of H with TH*W <= target_rows (fallback 1)."""
    best = 1
    for th in range(1, H + 1):
        if H % th == 0 and th * W <= target_rows:
            best = th
    return best


# ----------------------------------------------------------------------------
# Fused kernel.  grid = (N, T) with T = H // TH row tiles per image.
#   t == 0 : stage 1 (1x1 conv + BN + ReLU) for the whole image into the
#            halo'd f32 scratch (halo strips zeroed, interior overwritten).
#   every t: stage 2 (dilated 3x3 + BN + ReLU) for rows [t*TH, (t+1)*TH).
# ----------------------------------------------------------------------------
def _make_kernel(H, W, C1, Coutp, d, TH, T):
    Hp, Wp = H + 2 * d, W + 2 * d
    CW = TH * W
    lane_aligned = (CW % 128 == 0)

    def kernel(x_ref, w1_ref, s1_ref, b1_ref, w2_ref, s2_ref, b2_ref,
               o_ref, y1p_ref):
        t = pl.program_id(1)

        # ---- stage 1 (once per image) ----
        @pl.when(t == 0)
        def _stage1():
            z = y1p_ref.dtype
            # Zero ONLY the halo strips; the interior is fully overwritten below.
            y1p_ref[0:d, :, :] = jnp.zeros((d, Wp, C1), z)
            y1p_ref[d + H:Hp, :, :] = jnp.zeros((d, Wp, C1), z)
            y1p_ref[d:d + H, 0:d, :] = jnp.zeros((H, d, C1), z)
            y1p_ref[d:d + H, d + W:Wp, :] = jnp.zeros((H, d, C1), z)

            w1 = w1_ref[...]                    # (C1, Cinp) channel-major weight
            s1 = s1_ref[...]                    # (1, C1)
            b1 = b1_ref[...]                    # (1, C1)

            def body(q, carry):
                c0 = q * CW
                if lane_aligned:
                    c0 = pl.multiple_of(c0, 128)
                xc = x_ref[0, :, pl.ds(c0, CW)]                     # (Cinp, CW)
                y_cm = jnp.dot(w1, xc, preferred_element_type=jnp.float32)
                y = jnp.transpose(y_cm)                             # (CW, C1)
                y = jnp.maximum(y * s1 + b1, 0.0)
                y1p_ref[pl.ds(d + q * TH, TH), d:d + W, :] = y.reshape(TH, W, C1)
                return carry

            lax.fori_loop(0, T, body, 0)

        # ---- stage 2: dilated 3x3 as 3 K-packed bf16 MXU dots (K = 3*C1) ----
        s2 = s2_ref[...]
        b2 = b2_ref[...]
        r0 = t * TH
        acc = jnp.zeros((CW, Coutp), jnp.float32)
        for ky in range(3):                                         # static taps
            pieces = []
            for kx in range(3):
                # f32 scratch -> offset kx*d (d=8) is sublane-aligned.
                slab = y1p_ref[pl.ds(ky * d + r0, TH), kx * d:kx * d + W, :]
                pieces.append(slab.reshape(CW, C1).astype(jnp.bfloat16))
            packed = jnp.concatenate(pieces, axis=-1)               # (CW, 3*C1)
            acc = acc + jnp.dot(packed, w2_ref[ky],
                                preferred_element_type=jnp.float32)
        out = jnp.maximum(acc * s2 + b2, 0.0)
        o_ref[0, :, :] = out.astype(o_ref.dtype)                    # lane-dense

    return kernel


# ----------------------------------------------------------------------------
# Forward pass: NCHW in, NCHW out (matches PyTorch)
# ----------------------------------------------------------------------------
def aspp_br4_forward(x_nchw, params, *, dilation=8):
    N, Cin, H, W = x_nchw.shape
    d = int(dilation)
    C1 = 128
    Cout = params["w2"].shape[0]
    Coutp = _round_up(Cout, 128)                 # lane-dense output columns
    Cinp = _round_up(max(Cin, 1), 8)             # x channel pad: 8 sublanes only
    Hp, Wp = H + 2 * d, W + 2 * d
    HW = H * W
    TH = _pick_row_tile(H, W, 128)               # ~128 matmul rows per stage-2 tile
    T = H // TH
    CW = TH * W

    # x channel-major (N, Cinp, HW): HW lane-dense (no 32x Cin->128 inflation).
    x_cm = x_nchw.reshape(N, Cin, HW).astype(jnp.float32)
    x_cm = jnp.pad(x_cm, ((0, 0), (0, Cinp - Cin), (0, 0)))

    # ---- stage-1 params: fold conv bias + BN(eval) into scale/bias ----
    w1 = params["w1"].reshape(C1, Cin)
    w1 = jnp.pad(w1, ((0, 0), (0, Cinp - Cin))).astype(jnp.float32)   # (C1, Cinp)
    s1, b1 = _fold_bn(params["bn1_gamma"], params["bn1_beta"],
                      params["bn1_mean"], params["bn1_var"], params["b1"])
    s1 = s1.reshape(1, C1).astype(jnp.float32)
    b1 = b1.reshape(1, C1).astype(jnp.float32)

    # ---- stage-2 params: (Cout,128,3,3) -> (ky, kx*C1, Coutp) bf16, BN folded ----
    w2 = jnp.transpose(params["w2"], (2, 3, 1, 0)).reshape(3, 3 * C1, Cout)
    w2 = jnp.pad(w2, ((0, 0), (0, 0), (0, Coutp - Cout))).astype(jnp.bfloat16)
    s2, b2 = _fold_bn(params["bn2_gamma"], params["bn2_beta"],
                      params["bn2_mean"], params["bn2_var"], params["b2"])
    s2 = jnp.pad(s2, (0, Coutp - Cout), constant_values=1.0)
    b2 = jnp.pad(b2, (0, Coutp - Cout))
    s2 = s2.reshape(1, Coutp).astype(jnp.float32)
    b2 = b2.reshape(1, Coutp).astype(jnp.float32)

    kernel = _make_kernel(H, W, C1, Coutp, d, TH, T)

    # VMEM budget: scratch + double-buffered in/out blocks + resident weights.
    scratch_bytes = Hp * _round_up(Wp, 8) * C1 * 4
    x_block = Cinp * _round_up(HW, 128) * 4
    out_block = _round_up(CW, 8) * Coutp * 4
    w_bytes = (3 * 3 * C1 * Coutp * 2 + C1 * _round_up(Cinp, 128) * 4
               + 4 * _round_up(Coutp, 128) * 4)
    vmem_limit = min(int(1.5 * (scratch_bytes + 2 * (x_block + out_block + w_bytes)))
                     + (2 << 20), 100 * 1024 * 1024)

    flops = 2 * N * HW * (Cinp * C1 + 9 * C1 * Coutp)
    bytes_accessed = (N * Cinp * HW * 4 + C1 * Cinp * 4 + 9 * C1 * Coutp * 2
                      + 2 * (C1 + Coutp) * 4 + N * HW * Coutp * 4)

    out = pl.pallas_call(
        kernel,
        out_shape=jax.ShapeDtypeStruct((N, HW, Coutp), jnp.float32),
        grid_spec=pltpu.PrefetchScalarGridSpec(
            num_scalar_prefetch=0,
            grid=(N, T),
            in_specs=[
                pl.BlockSpec((1, Cinp, HW), lambda n, t: (n, 0, 0)),      # x (per image)
                pl.BlockSpec((C1, Cinp), lambda n, t: (0, 0)),            # w1 (resident)
                pl.BlockSpec((1, C1), lambda n, t: (0, 0)),               # s1
                pl.BlockSpec((1, C1), lambda n, t: (0, 0)),               # b1
                pl.BlockSpec((3, 3 * C1, Coutp), lambda n, t: (0, 0, 0)), # w2 packed
                pl.BlockSpec((1, Coutp), lambda n, t: (0, 0)),            # s2
                pl.BlockSpec((1, Coutp), lambda n, t: (0, 0)),            # b2
            ],
            out_specs=pl.BlockSpec((1, CW, Coutp), lambda n, t: (n, t, 0)),
            scratch_shapes=[pltpu.VMEM((Hp, Wp, C1), jnp.float32)],       # halo'd y1
        ),
        compiler_params=pltpu.CompilerParams(
            dimension_semantics=("parallel", "arbitrary"),
            vmem_limit_bytes=vmem_limit),
        cost_estimate=pl.CostEstimate(
            flops=flops, transcendentals=0, bytes_accessed=bytes_accessed),
    )(x_cm, w1, s1, b1, w2, s2, b2)

    y = out[:, :, :Cout].reshape(N, H, W, Cout)
    return jnp.transpose(y, (0, 3, 1, 2))                                 # NHWC -> NCHW


# ----------------------------------------------------------------------------
# Parameter container + deterministic init (shapes from _ASPP_BR4.__init__)
# ----------------------------------------------------------------------------
def init_params(key, in_channel, out_channel):
    ks = jax.random.split(key, 12)
    p = {}
    # conv1: 1x1, in_channel -> 128
    p["w1"] = 0.1 * jax.random.normal(ks[0], (128, in_channel, 1, 1), jnp.float32)
    p["b1"] = 0.05 * jax.random.normal(ks[1], (128,), jnp.float32)
    p["bn1_gamma"] = 1.0 + 0.1 * jax.random.normal(ks[2], (128,), jnp.float32)
    p["bn1_beta"] = 0.1 * jax.random.normal(ks[3], (128,), jnp.float32)
    p["bn1_mean"] = 0.05 * jax.random.normal(ks[4], (128,), jnp.float32)
    p["bn1_var"] = jax.random.uniform(ks[5], (128,), jnp.float32, 0.5, 1.5)
    # conv2: 3x3 dilated, 128 -> out_channel
    p["w2"] = 0.05 * jax.random.normal(ks[6], (out_channel, 128, 3, 3), jnp.float32)
    p["b2"] = 0.05 * jax.random.normal(ks[7], (out_channel,), jnp.float32)
    p["bn2_gamma"] = 1.0 + 0.1 * jax.random.normal(ks[8], (out_channel,), jnp.float32)
    p["bn2_beta"] = 0.1 * jax.random.normal(ks[9], (out_channel,), jnp.float32)
    p["bn2_mean"] = 0.05 * jax.random.normal(ks[10], (out_channel,), jnp.float32)
    p["bn2_var"] = jax.random.uniform(ks[11], (out_channel,), jnp.float32, 0.5, 1.5)
    return p


# ----------------------------------------------------------------------------
# Pure-JAX reference (lax.conv, f32) for a silent correctness check
# ----------------------------------------------------------------------------
def aspp_br4_reference(x_nchw, params, *, dilation=8, eps=1e-5):
    dn = ("NCHW", "OIHW", "NCHW")
    y = lax.conv_general_dilated(x_nchw, params["w1"], (1, 1), "VALID",
                                 dimension_numbers=dn)
    y = y + params["b1"][None, :, None, None]
    s1, b1 = _fold_bn(params["bn1_gamma"], params["bn1_beta"],
                      params["bn1_mean"], params["bn1_var"],
                      jnp.zeros_like(params["b1"]), eps)
    y = jnp.maximum(y * s1[None, :, None, None] + b1[None, :, None, None], 0.0)

    y = lax.conv_general_dilated(
        y, params["w2"], (1, 1),
        padding=((dilation, dilation), (dilation, dilation)),
        rhs_dilation=(dilation, dilation), dimension_numbers=dn)
    y = y + params["b2"][None, :, None, None]
    s2, b2 = _fold_bn(params["bn2_gamma"], params["bn2_beta"],
                      params["bn2_mean"], params["bn2_var"],
                      jnp.zeros_like(params["b2"]), eps)
    y = jnp.maximum(y * s2[None, :, None, None] + b2[None, :, None, None], 0.0)
    return y


if __name__ == "__main__":
    key = jax.random.PRNGKey(0)
    k_x, k_p = jax.random.split(key)

    N, in_channel, H, W = 2, 4, 16, 16
    out_channel = 32

    x = jax.random.normal(k_x, (N, in_channel, H, W), jnp.float32)
    params = init_params(k_p, in_channel, out_channel)

    out = jax.block_until_ready(aspp_br4_forward(x, params))
    ref = jax.block_until_ready(aspp_br4_reference(x, params))

    assert out.shape == (N, out_channel, H, W)
    # bf16 MXU inputs with f32 accumulation -> loosen tolerance slightly vs f32.
    assert bool(jnp.allclose(out, ref, atol=2e-2, rtol=2e-2)), "mismatch vs reference"

    print("KERNEL_OK")
</pallas_src>

<mosaic_0001>
module attributes {stable_mosaic.version = 11 : i64} {
  func.func @kernel(%arg0: i32, %arg1: i32, %arg2: memref<1x8x256xf32, #tpu.memory_space<vmem>>, %arg3: memref<128x8xf32, #tpu.memory_space<vmem>>, %arg4: memref<1x128xf32, #tpu.memory_space<vmem>>, %arg5: memref<1x128xf32, #tpu.memory_space<vmem>>, %arg6: memref<3x384x128xbf16, #tpu.memory_space<vmem>>, %arg7: memref<1x128xf32, #tpu.memory_space<vmem>>, %arg8: memref<1x128xf32, #tpu.memory_space<vmem>>, %arg9: memref<1x128x128xf32, #tpu.memory_space<vmem>>, %arg10: memref<32x32x128xf32, #tpu.memory_space<vmem>>) attributes {dimension_semantics = [#tpu.dimension_semantics<parallel>, #tpu.dimension_semantics<arbitrary>], iteration_bounds = array<i64: 2, 2>, scalar_prefetch = 0 : i64, scratch_operands = 1 : i64, tpu.core_type = #tpu.core_type<tc>, window_params = [{transform_indices = @transform_0, window_bounds = array<i64: 1, 8, 256>}, {pipeline_mode = #tpu.pipeline_mode<synchronous>, transform_indices = @transform_1, window_bounds = array<i64: 128, 8>}, {pipeline_mode = #tpu.pipeline_mode<synchronous>, transform_indices = @transform_2, window_bounds = array<i64: 1, 128>}, {pipeline_mode = #tpu.pipeline_mode<synchronous>, transform_indices = @transform_3, window_bounds = array<i64: 1, 128>}, {pipeline_mode = #tpu.pipeline_mode<synchronous>, transform_indices = @transform_4, window_bounds = array<i64: 3, 384, 128>}, {pipeline_mode = #tpu.pipeline_mode<synchronous>, transform_indices = @transform_5, window_bounds = array<i64: 1, 128>}, {pipeline_mode = #tpu.pipeline_mode<synchronous>, transform_indices = @transform_6, window_bounds = array<i64: 1, 128>}, {transform_indices = @transform_7, window_bounds = array<i64: 1, 128, 128>}]} {
    %c0_i32 = arith.constant 0 : i32
    %0 = arith.cmpi eq, %arg1, %c0_i32 : i32
    %1 = arith.extui %0 : i1 to i32
    %c0_i32_0 = arith.constant 0 : i32
    %2 = arith.cmpi ne, %1, %c0_i32_0 : i32
    scf.if %2 {
      %cst_42 = arith.constant 0.000000e+00 : f32
      %76 = vector.broadcast %cst_42 : f32 to vector<8x32x128xf32>
      %c0_43 = arith.constant 0 : index
      %c0_44 = arith.constant 0 : index
      %c0_45 = arith.constant 0 : index
      %77 = vector.load %arg10[%c0_43, %c0_44, %c0_45] : memref<32x32x128xf32, #tpu.memory_space<vmem>>, vector<8x32x128xf32>
      tpu.vector_store %arg10[%c0_43, %c0_44, %c0_45], %76 {strides = array<i32>} : memref<32x32x128xf32, #tpu.memory_space<vmem>>, vector<8x32x128xf32>,
      %cst_46 = arith.constant 0.000000e+00 : f32
      %78 = vector.broadcast %cst_46 : f32 to vector<8x32x128xf32>
      %c24 = arith.constant 24 : index
      %c0_47 = arith.constant 0 : index
      %c0_48 = arith.constant 0 : index
      %79 = vector.load %arg10[%c24, %c0_47, %c0_48] : memref<32x32x128xf32, #tpu.memory_space<vmem>>, vector<8x32x128xf32>
      tpu.vector_store %arg10[%c24, %c0_47, %c0_48], %78 {strides = array<i32>} : memref<32x32x128xf32, #tpu.memory_space<vmem>>, vector<8x32x128xf32>,
      %cst_49 = arith.constant 0.000000e+00 : f32
      %80 = vector.broadcast %cst_49 : f32 to vector<16x8x128xf32>
      %c8_50 = arith.constant 8 : index
      %c0_51 = arith.constant 0 : index
      %c0_52 = arith.constant 0 : index
      %81 = vector.load %arg10[%c8_50, %c0_51, %c0_52] : memref<32x32x128xf32, #tpu.memory_space<vmem>>, vector<16x8x128xf32>
      tpu.vector_store %arg10[%c8_50, %c0_51, %c0_52], %80 {strides = array<i32>} : memref<32x32x128xf32, #tpu.memory_space<vmem>>, vector<16x8x128xf32>,
      %cst_53 = arith.constant 0.000000e+00 : f32
      %82 = vector.broadcast %cst_53 : f32 to vector<16x8x128xf32>
      %c8_54 = arith.constant 8 : index
      %c24_55 = arith.constant 24 : index
      %c0_56 = arith.constant 0 : index
      %83 = vector.load %arg10[%c8_54, %c24_55, %c0_56] : memref<32x32x128xf32, #tpu.memory_space<vmem>>, vector<16x8x128xf32>
      tpu.vector_store %arg10[%c8_54, %c24_55, %c0_56], %82 {strides = array<i32>} : memref<32x32x128xf32, #tpu.memory_space<vmem>>, vector<16x8x128xf32>,
      %c0_57 = arith.constant 0 : index
      %c0_58 = arith.constant 0 : index
      %84 = vector.load %arg3[%c0_57, %c0_58] : memref<128x8xf32, #tpu.memory_space<vmem>>, vector<128x8xf32>
      %c0_59 = arith.constant 0 : index
      %c0_60 = arith.constant 0 : index
      %85 = vector.load %arg4[%c0_59, %c0_60] : memref<1x128xf32, #tpu.memory_space<vmem>>, vector<1x128xf32>
      %c0_61 = arith.constant 0 : index
      %c0_62 = arith.constant 0 : index
      %86 = vector.load %arg5[%c0_61, %c0_62] : memref<1x128xf32, #tpu.memory_space<vmem>>, vector<1x128xf32>
      %c0_i32_63 = arith.constant 0 : i32
      %c2_i32 = arith.constant 2 : i32
      %87 = arith.addi %c0_i32_63, %c2_i32 : i32
      %c1_i32 = arith.constant 1 : i32
      scf.for %arg11 = %c0_i32_63 to %87 step %c1_i32  : i32 {
        %c128_i32 = arith.constant 128 : i32
        %88 = arith.muli %arg11, %c128_i32 : i32
        %89 = tpu.assume_multiple %88, 128 : i32
        %c0_65 = arith.constant 0 : index
        %c0_66 = arith.constant 0 : index
        %90 = arith.index_cast %89 : i32 to index
        %91 = vector.load %arg2[%c0_65, %c0_66, %90] : memref<1x8x256xf32, #tpu.memory_space<vmem>>, vector<1x8x128xf32>
        %92 = vector.shape_cast %91 : vector<1x8x128xf32> to vector<8x128xf32>
        %cst_67 = arith.constant dense<0.000000e+00> : vector<128x128xf32>
        %93 = tpu.matmul %84, %92, %cst_67 {dimension_numbers = #tpu.dot_dimension_numbers<[1], [0], [0], [1], [0, 0, 1, 1], [], []>} : vector<128x8xf32>, vector<8x128xf32>, vector<128x128xf32> -> vector<128x128xf32>
        %94 = tpu.transpose %93, [1, 0] : vector<128x128xf32> -> vector<128x128xf32>
        %95 = vector.broadcast %85 : vector<1x128xf32> to vector<128x128xf32>
        %96 = arith.mulf %94, %95 : vector<128x128xf32>
        %97 = vector.broadcast %86 : vector<1x128xf32> to vector<128x128xf32>
        %98 = arith.addf %96, %97 : vector<128x128xf32>
        %cst_68 = arith.constant 0.000000e+00 : f32
        %99 = vector.broadcast %cst_68 : f32 to vector<128x128xf32>
        %100 = arith.maximumf %98, %99 : vector<128x128xf32>
        %101 = vector.shape_cast %100 : vector<128x128xf32> to vector<8x16x128xf32>
        %c8_i32_69 = arith.constant 8 : i32
        %102 = arith.muli %arg11, %c8_i32_69 : i32
        %c8_i32_70 = arith.constant 8 : i32
        %103 = arith.addi %c8_i32_70, %102 : i32
        %104 = arith.index_cast %103 : i32 to index
        %c8_71 = arith.constant 8 : index
        %c0_72 = arith.constant 0 : index
        %105 = vector.load %arg10[%104, %c8_71, %c0_72] : memref<32x32x128xf32, #tpu.memory_space<vmem>>, vector<8x16x128xf32>
        tpu.vector_store %arg10[%104, %c8_71, %c0_72], %101 {strides = array<i32>} : memref<32x32x128xf32, #tpu.memory_space<vmem>>, vector<8x16x128xf32>,
      }
      %c2_i32_64 = arith.constant 2 : i32
    } else {
    }
    %c0 = arith.constant 0 : index
    %c0_1 = arith.constant 0 : index
    %3 = vector.load %arg7[%c0, %c0_1] : memref<1x128xf32, #tpu.memory_space<vmem>>, vector<1x128xf32>
    %c0_2 = arith.constant 0 : index
    %c0_3 = arith.constant 0 : index
    %4 = vector.load %arg8[%c0_2, %c0_3] : memref<1x128xf32, #tpu.memory_space<vmem>>, vector<1x128xf32>
    %c8_i32 = arith.constant 8 : i32
    %5 = arith.muli %arg1, %c8_i32 : i32
    %cst = arith.constant 0.000000e+00 : f32
    %6 = vector.broadcast %cst : f32 to vector<128x128xf32>
    %c0_i32_4 = arith.constant 0 : i32
    %7 = arith.addi %c0_i32_4, %5 : i32
    %8 = arith.index_cast %7 : i32 to index
    %c0_5 = arith.constant 0 : index
    %c0_6 = arith.constant 0 : index
    %9 = vector.load %arg10[%8, %c0_5, %c0_6] : memref<32x32x128xf32, #tpu.memory_space<vmem>>, vector<8x16x128xf32>
    %10 = vector.shape_cast %9 : vector<8x16x128xf32> to vector<128x128xf32>
    %11 = arith.truncf %10 : vector<128x128xf32> to vector<128x128xbf16>
    %c0_i32_7 = arith.constant 0 : i32
    %12 = arith.addi %c0_i32_7, %5 : i32
    %13 = arith.index_cast %12 : i32 to index
    %c8 = arith.constant 8 : index
    %c0_8 = arith.constant 0 : index
    %14 = vector.load %arg10[%13, %c8, %c0_8] : memref<32x32x128xf32, #tpu.memory_space<vmem>>, vector<8x16x128xf32>
    %15 = vector.shape_cast %14 : vector<8x16x128xf32> to vector<128x128xf32>
    %16 = arith.truncf %15 : vector<128x128xf32> to vector<128x128xbf16>
    %c0_i32_9 = arith.constant 0 : i32
    %17 = arith.addi %c0_i32_9, %5 : i32
    %18 = arith.index_cast %17 : i32 to index
    %c16 = arith.constant 16 : index
    %c0_10 = arith.constant 0 : index
    %19 = vector.load %arg10[%18, %c16, %c0_10] : memref<32x32x128xf32, #tpu.memory_space<vmem>>, vector<8x16x128xf32>
    %20 = vector.shape_cast %19 : vector<8x16x128xf32> to vector<128x128xf32>
    %21 = arith.truncf %20 : vector<128x128xf32> to vector<128x128xbf16>
    %22 = tpu.concatenate %11, %16, %21 in 1 : vector<128x128xbf16>, vector<128x128xbf16>, vector<128x128xbf16> -> vector<128x384xbf16>
    %c0_11 = arith.constant 0 : index
    %c0_12 = arith.constant 0 : index
    %c0_13 = arith.constant 0 : index
    %23 = vector.load %arg6[%c0_11, %c0_12, %c0_13] : memref<3x384x128xbf16, #tpu.memory_space<vmem>>, vector<1x384x128xbf16>
    %24 = vector.shape_cast %23 : vector<1x384x128xbf16> to vector<384x128xbf16>
    %cst_14 = arith.constant dense<0.000000e+00> : vector<128x128xf32>
    %25 = tpu.matmul %22, %24, %cst_14 {dimension_numbers = #tpu.dot_dimension_numbers<[1], [0], [0], [1], [0, 0, 1, 1], [], []>} : vector<128x384xbf16>, vector<384x128xbf16>, vector<128x128xf32> -> vector<128x128xf32>
    %26 = arith.addf %6, %25 : vector<128x128xf32>
    %c8_i32_15 = arith.constant 8 : i32
    %27 = arith.addi %c8_i32_15, %5 : i32
    %28 = arith.index_cast %27 : i32 to index
    %c0_16 = arith.constant 0 : index
    %c0_17 = arith.constant 0 : index
    %29 = vector.load %arg10[%28, %c0_16, %c0_17] : memref<32x32x128xf32, #tpu.memory_space<vmem>>, vector<8x16x128xf32>
    %30 = vector.shape_cast %29 : vector<8x16x128xf32> to vector<128x128xf32>
    %31 = arith.truncf %30 : vector<128x128xf32> to vector<128x128xbf16>
    %c8_i32_18 = arith.constant 8 : i32
    %32 = arith.addi %c8_i32_18, %5 : i32
    %33 = arith.index_cast %32 : i32 to index
    %c8_19 = arith.constant 8 : index
    %c0_20 = arith.constant 0 : index
    %34 = vector.load %arg10[%33, %c8_19, %c0_20] : memref<32x32x128xf32, #tpu.memory_space<vmem>>, vector<8x16x128xf32>
    %35 = vector.shape_cast %34 : vector<8x16x128xf32> to vector<128x128xf32>
    %36 = arith.truncf %35 : vector<128x128xf32> to vector<128x128xbf16>
    %c8_i32_21 = arith.constant 8 : i32
    %37 = arith.addi %c8_i32_21, %5 : i32
    %38 = arith.index_cast %37 : i32 to index
    %c16_22 = arith.constant 16 : index
    %c0_23 = arith.constant 0 : index
    %39 = vector.load %arg10[%38, %c16_22, %c0_23] : memref<32x32x128xf32, #tpu.memory_space<vmem>>, vector<8x16x128xf32>
    %40 = vector.shape_cast %39 : vector<8x16x128xf32> to vector<128x128xf32>
    %41 = arith.truncf %40 : vector<128x128xf32> to vector<128x128xbf16>
    %42 = tpu.concatenate %31, %36, %41 in 1 : vector<128x128xbf16>, vector<128x128xbf16>, vector<128x128xbf16> -> vector<128x384xbf16>
    %c1 = arith.constant 1 : index
    %c0_24 = arith.constant 0 : index
    %c0_25 = arith.constant 0 : index
    %43 = vector.load %arg6[%c1, %c0_24, %c0_25] : memref<3x384x128xbf16, #tpu.memory_space<vmem>>, vector<1x384x128xbf16>
    %44 = vector.shape_cast %43 : vector<1x384x128xbf16> to vector<384x128xbf16>
    %cst_26 = arith.constant dense<0.000000e+00> : vector<128x128xf32>
    %45 = tpu.matmul %42, %44, %cst_26 {dimension_numbers = #tpu.dot_dimension_numbers<[1], [0], [0], [1], [0, 0, 1, 1], [], []>} : vector<128x384xbf16>, vector<384x128xbf16>, vector<128x128xf32> -> vector<128x128xf32>
    %46 = arith.addf %26, %45 : vector<128x128xf32>
    %c16_i32 = arith.constant 16 : i32
    %47 = arith.addi %c16_i32, %5 : i32
    %48 = arith.index_cast %47 : i32 to index
    %c0_27 = arith.constant 0 : index
    %c0_28 = arith.constant 0 : index
    %49 = vector.load %arg10[%48, %c0_27, %c0_28] : memref<32x32x128xf32, #tpu.memory_space<vmem>>, vector<8x16x128xf32>
    %50 = vector.shape_cast %49 : vector<8x16x128xf32> to vector<128x128xf32>
    %51 = arith.truncf %50 : vector<128x128xf32> to vector<128x128xbf16>
    %c16_i32_29 = arith.constant 16 : i32
    %52 = arith.addi %c16_i32_29, %5 : i32
    %53 = arith.index_cast %52 : i32 to index
    %c8_30 = arith.constant 8 : index
    %c0_31 = arith.constant 0 : index
    %54 = vector.load %arg10[%53, %c8_30, %c0_31] : memref<32x32x128xf32, #tpu.memory_space<vmem>>, vector<8x16x128xf32>
    %55 = vector.shape_cast %54 : vector<8x16x128xf32> to vector<128x128xf32>
    %56 = arith.truncf %55 : vector<128x128xf32> to vector<128x128xbf16>
    %c16_i32_32 = arith.constant 16 : i32
    %57 = arith.addi %c16_i32_32, %5 : i32
    %58 = arith.index_cast %57 : i32 to index
    %c16_33 = arith.constant 16 : index
    %c0_34 = arith.constant 0 : index
    %59 = vector.load %arg10[%58, %c16_33, %c0_34] : memref<32x32x128xf32, #tpu.memory_space<vmem>>, vector<8x16x128xf32>
    %60 = vector.shape_cast %59 : vector<8x16x128xf32> to vector<128x128xf32>
    %61 = arith.truncf %60 : vector<128x128xf32> to vector<128x128xbf16>
    %62 = tpu.concatenate %51, %56, %61 in 1 : vector<128x128xbf16>, vector<128x128xbf16>, vector<128x128xbf16> -> vector<128x384xbf16>
    %c2 = arith.constant 2 : index
    %c0_35 = arith.constant 0 : index
    %c0_36 = arith.constant 0 : index
    %63 = vector.load %arg6[%c2, %c0_35, %c0_36] : memref<3x384x128xbf16, #tpu.memory_space<vmem>>, vector<1x384x128xbf16>
    %64 = vector.shape_cast %63 : vector<1x384x128xbf16> to vector<384x128xbf16>
    %cst_37 = arith.constant dense<0.000000e+00> : vector<128x128xf32>
    %65 = tpu.matmul %62, %64, %cst_37 {dimension_numbers = #tpu.dot_dimension_numbers<[1], [0], [0], [1], [0, 0, 1, 1], [], []>} : vector<128x384xbf16>, vector<384x128xbf16>, vector<128x128xf32> -> vector<128x128xf32>
    %66 = arith.addf %46, %65 : vector<128x128xf32>
    %67 = vector.broadcast %3 : vector<1x128xf32> to vector<128x128xf32>
    %68 = arith.mulf %66, %67 : vector<128x128xf32>
    %69 = vector.broadcast %4 : vector<1x128xf32> to vector<128x128xf32>
    %70 = arith.addf %68, %69 : vector<128x128xf32>
    %cst_38 = arith.constant 0.000000e+00 : f32
    %71 = vector.broadcast %cst_38 : f32 to vector<128x128xf32>
    %72 = arith.maximumf %70, %71 : vector<128x128xf32>
    %c0_39 = arith.constant 0 : index
    %c0_40 = arith.constant 0 : index
    %c0_41 = arith.constant 0 : index
    %73 = vector.load %arg9[%c0_39, %c0_40, %c0_41] : memref<1x128x128xf32, #tpu.memory_space<vmem>>, vector<1x128x128xf32>
    %74 = vector.shape_cast %73 : vector<1x128x128xf32> to vector<128x128xf32>
    %75 = vector.shape_cast %72 : vector<128x128xf32> to vector<1x128x128xf32>
    tpu.vector_store %arg9[%c0_39, %c0_40, %c0_41], %75 {strides = array<i32>} : memref<1x128x128xf32, #tpu.memory_space<vmem>>, vector<1x128x128xf32>,
    return
  }
  func.func @transform_0(%arg0: i32, %arg1: i32) -> (i32, i32, i32) {
    %c0_i32 = arith.constant 0 : i32
    %c0_i32_0 = arith.constant 0 : i32
    %c0_i32_1 = arith.constant 0 : i32
    return %arg0, %c0_i32, %c0_i32_0 : i32, i32, i32
  }
  func.func @transform_1(%arg0: i32, %arg1: i32) -> (i32, i32) {
    %c0_i32 = arith.constant 0 : i32
    %c0_i32_0 = arith.constant 0 : i32
    %c0_i32_1 = arith.constant 0 : i32
    return %c0_i32, %c0_i32_0 : i32, i32
  }
  func.func @transform_2(%arg0: i32, %arg1: i32) -> (i32, i32) {
    %c0_i32 = arith.constant 0 : i32
    %c0_i32_0 = arith.constant 0 : i32
    %c0_i32_1 = arith.constant 0 : i32
    return %c0_i32, %c0_i32_0 : i32, i32
  }
  func.func @transform_3(%arg0: i32, %arg1: i32) -> (i32, i32) {
    %c0_i32 = arith.constant 0 : i32
    %c0_i32_0 = arith.constant 0 : i32
    %c0_i32_1 = arith.constant 0 : i32
    return %c0_i32, %c0_i32_0 : i32, i32
  }
  func.func @transform_4(%arg0: i32, %arg1: i32) -> (i32, i32, i32) {
    %c0_i32 = arith.constant 0 : i32
    %c0_i32_0 = arith.constant 0 : i32
    %c0_i32_1 = arith.constant 0 : i32
    %c0_i32_2 = arith.constant 0 : i32
    return %c0_i32, %c0_i32_0, %c0_i32_1 : i32, i32, i32
  }
  func.func @transform_5(%arg0: i32, %arg1: i32) -> (i32, i32) {
    %c0_i32 = arith.constant 0 : i32
    %c0_i32_0 = arith.constant 0 : i32
    %c0_i32_1 = arith.constant 0 : i32
    return %c0_i32, %c0_i32_0 : i32, i32
  }
  func.func @transform_6(%arg0: i32, %arg1: i32) -> (i32, i32) {
    %c0_i32 = arith.constant 0 : i32
    %c0_i32_0 = arith.constant 0 : i32
    %c0_i32_1 = arith.constant 0 : i32
    return %c0_i32, %c0_i32_0 : i32, i32
  }
  func.func @transform_7(%arg0: i32, %arg1: i32) -> (i32, i32, i32) {
    %c0_i32 = arith.constant 0 : i32
    %c0_i32_0 = arith.constant 0 : i32
    return %arg0, %arg1, %c0_i32 : i32, i32, i32
  }
}

</mosaic_0001>

<llo_original>
// kernel: tpu_custom_call.1
$region0: #{tpu_custom_call.1}
  #allocation0 [shape = 'u32[]', space=smem, size = 0x4, offset = 0x4, fixed_abs, tag = 'smem constant byte address 0x4 - core index']
  #allocation1 [shape = 'u32[72,128]{1,0:T(1,128)}', space=vmem, size = 0x9000, scoped, tag = 'internal scratch']
  #allocation2 [shape = 'f32[32,32,128]{2,1,0:T(8,128)}', space=vmem, size = 0x80000, scoped, tag = 'scratch operand']
  %s0 = inlined_call_operand.vmem [shape: f32[2,8,256], index: 0, kind: input, shape index: {}]
  %s1 = inlined_call_operand.vmem [shape: f32[128,8], index: 1, kind: input, shape index: {}]
  %s2 = inlined_call_operand.vmem [shape: f32[1,128], index: 2, kind: input, shape index: {}]
  %s3 = inlined_call_operand.vmem [shape: f32[1,128], index: 3, kind: input, shape index: {}]
  %s4 = inlined_call_operand.hbm [shape: bf16[3,384,128], index: 4, kind: input, shape index: {}]
  %s5 = inlined_call_operand.vmem [shape: f32[1,128], index: 5, kind: input, shape index: {}]
  %s6 = inlined_call_operand.vmem [shape: f32[1,128], index: 6, kind: input, shape index: {}]
  %s7 = inlined_call_operand.hbm [shape: f32[2,256,128], index: 7, kind: output, shape index: {}]
  %s8 = sld [smem:[#allocation0]]
  $region76: #{tpu_custom_call.1} parent=0
    _
  %s10 = ssub.s32 1, %s8
  %s11 = scalar_select 0, %s10, %s8
  $region1: #{tpu_custom_call.1} parent=0
    #allocation3 [shape = 'u8[294912]{0}', space=vmem, size = 0x48000, scoped, tag = 'input window, operand 4, single buffered']
    #allocation4 [shape = 's32[2]{0}', space=sflag, size = 0x8, scoped, tag = 'scoped memory for tpu_custom_call.1']
    #allocation5 [shape = 's32[2]{0}', space=sflag, size = 0x8, scoped, tag = 'scoped memory for tpu_custom_call.1']
    #allocation6 [shape = 'u8[131072]{0}', space=vmem, size = 0x20000, scoped, tag = 'output window, operand 0']
    %12 = vsyncpa [#allocation4], 0
    %13 = vsyncpa [#allocation5], 0
    %s14 = scalar_lea.sflag [#allocation5], 1
    %15 = vsyncpa %s14, 0
    loop: start=0, step=1, limit=6
    $region2: #{tpu_custom_call.1} parent=1 // loop_pre_header
      _
    $region3: #{tpu_custom_call.1} parent=1 // loop_header
      %s17 = sphi 0, %s21
      %p18 = scmp.ge.s32.totalorder %s17, 6
      %s24 = sphi 0, %s36
      %s25 = sphi 0, %s32
      %s26 = sphi 0, %s24
      %s27 = sphi 0, %s25
      %s28 = sphi 0, %s26
      %s29 = sphi 0, %s27
      %s39 = sphi 0, %s41
      %s42 = sphi 0, %s39
      %s43 = sphi 0, %s42
      %s59 = sphi 0, %s43
      %s63 = sphi 0, %s63
      %s65 = sphi 0, %s63
      %s66 = sphi 0, %s65
      %s80 = sphi 0, %s66
      %s84 = sphi 0, %s84
      %s86 = sphi 0, %s84
      %s87 = sphi 0, %s86
      %s101 = sphi 0, %s87
      %s105 = sphi 0, %s105
      %s107 = sphi 0, %s105
      %s108 = sphi 0, %s107
      %s122 = sphi 0, %s108
      %s126 = sphi 0, %s126
      %s128 = sphi 0, %s126
      %s129 = sphi 0, %s128
      %s143 = sphi 0, %s129
      %s147 = sphi 0, %s147
      %s149 = sphi 0, %s147
      %s150 = sphi 0, %s149
      %s164 = sphi 0, %s150
      %s168 = sphi 0, %s168
      %s170 = sphi 0, %s168
      %s171 = sphi 0, %s170
      %s185 = sphi 0, %s171
      %s193 = sphi 0, %s195
      %s196 = sphi 0, %s193
      %s197 = sphi 0, %s196
      %s213 = sphi 0, %s197
    $region4: #{tpu_custom_call.1} parent=1 // loop_header_branch
      %20 = sbr.rel (%p18) target = $region8
    $region5: #{tpu_custom_call.1} parent=1 // loop_body
      %s22 = ssub.s32 %s17, 1
      %s23 = ssub.s32 %s17, 2
      %s30 = sadd.s32 1, %s25
      %p31 = scmp.ge.s32.totalorder %s30, 2
      %s32 = scalar_select %p31, 0, %s30
      %s33 = sadd.s32 1, %s24
      %s34 = scalar_select %p31, %s33, %s24
      %p35 = scmp.ge.s32.totalorder %s34, 2
      %s36 = scalar_select %p35, 0, %s34
      %s37 = ssub.s32 %s24, %s36
      %p38 = scmp.eq.s32.totalorder %s37, 0
      %s40 = sadd.s32 %s39, 1
      %s41 = scalar_select %p38, %s39, %s40
      %p44 = pneg %p38
      %p45 = scmp.eq.s32.totalorder %s17, 3
      %p46 = por %p44, %p45
      %p47 = scmp.ne.s32.totalorder %s39, %s42
      %p48 = scmp.eq.s32.totalorder %s17, 0
      %p49 = por %p47, %p48
      %p50 = scmp.ne.s32.totalorder %s39, %s42
      %p51 = scmp.eq.s32.totalorder %s22, 3
      %p52 = por %p50, %p51
      %p53 = scmp.ne.s32.totalorder %s42, %s43
      %p54 = scmp.eq.s32.totalorder %s22, 0
      %p55 = por %p53, %p54
      %p56 = scmp.ne.s32.totalorder %s42, %s43
      %p57 = scmp.eq.s32.totalorder %s23, 3
      %p58 = por %p56, %p57
      %p60 = scmp.ne.s32.totalorder %s43, %s59
      %p61 = scmp.eq.s32.totalorder %s23, 0
      %p62 = por %p60, %p61
      %s64 = sadd.s32 %s63, 1
      %p67 = scmp.eq.s32.totalorder %s17, 3
      %p68 = scmp.ne.s32.totalorder %s63, %s65
      %p69 = scmp.eq.s32.totalorder %s17, 0
      %p70 = por %p68, %p69
      %p71 = scmp.ne.s32.totalorder %s63, %s65
      %p72 = scmp.eq.s32.totalorder %s22, 3
      %p73 = por %p71, %p72
      %p74 = scmp.ne.s32.totalorder %s65, %s66
      %p75 = scmp.eq.s32.totalorder %s22, 0
      %p76 = por %p74, %p75
      %p77 = scmp.ne.s32.totalorder %s65, %s66
      %p78 = scmp.eq.s32.totalorder %s23, 3
      %p79 = por %p77, %p78
      %p81 = scmp.ne.s32.totalorder %s66, %s80
      %p82 = scmp.eq.s32.totalorder %s23, 0
      %p83 = por %p81, %p82
      %s85 = sadd.s32 %s84, 1
      %p88 = scmp.eq.s32.totalorder %s17, 3
      %p89 = scmp.ne.s32.totalorder %s84, %s86
      %p90 = scmp.eq.s32.totalorder %s17, 0
      %p91 = por %p89, %p90
      %p92 = scmp.ne.s32.totalorder %s84, %s86
      %p93 = scmp.eq.s32.totalorder %s22, 3
      %p94 = por %p92, %p93
      %p95 = scmp.ne.s32.totalorder %s86, %s87
      %p96 = scmp.eq.s32.totalorder %s22, 0
      %p97 = por %p95, %p96
      %p98 = scmp.ne.s32.totalorder %s86, %s87
      %p99 = scmp.eq.s32.totalorder %s23, 3
      %p100 = por %p98, %p99
      %p102 = scmp.ne.s32.totalorder %s87, %s101
      %p103 = scmp.eq.s32.totalorder %s23, 0
      %p104 = por %p102, %p103
      %s106 = sadd.s32 %s105, 1
      %p109 = scmp.eq.s32.totalorder %s17, 3
      %p110 = scmp.ne.s32.totalorder %s105, %s107
      %p111 = scmp.eq.s32.totalorder %s17, 0
      %p112 = por %p110, %p111
      %p113 = scmp.ne.s32.totalorder %s105, %s107
      %p114 = scmp.eq.s32.totalorder %s22, 3
      %p115 = por %p113, %p114
      %p116 = scmp.ne.s32.totalorder %s107, %s108
      %p117 = scmp.eq.s32.totalorder %s22, 0
      %p118 = por %p116, %p117
      %p119 = scmp.ne.s32.totalorder %s107, %s108
      %p120 = scmp.eq.s32.totalorder %s23, 3
      %p121 = por %p119, %p120
      %p123 = scmp.ne.s32.totalorder %s108, %s122
      %p124 = scmp.eq.s32.totalorder %s23, 0
      %p125 = por %p123, %p124
      %s127 = sadd.s32 %s126, 1
      %p130 = scmp.eq.s32.totalorder %s17, 3
      %p131 = scmp.ne.s32.totalorder %s126, %s128
      %p132 = scmp.eq.s32.totalorder %s17, 0
      %p133 = por %p131, %p132
      %p134 = scmp.ne.s32.totalorder %s126, %s128
      %p135 = scmp.eq.s32.totalorder %s22, 3
      %p136 = por %p134, %p135
      %p137 = scmp.ne.s32.totalorder %s128, %s129
      %p138 = scmp.eq.s32.totalorder %s22, 0
      %p139 = por %p137, %p138
      %p140 = scmp.ne.s32.totalorder %s128, %s129
      %p141 = scmp.eq.s32.totalorder %s23, 3
      %p142 = por %p140, %p141
      %p144 = scmp.ne.s32.totalorder %s129, %s143
      %p145 = scmp.eq.s32.totalorder %s23, 0
      %p146 = por %p144, %p145
      %s148 = sadd.s32 %s147, 1
      %p151 = scmp.eq.s32.totalorder %s17, 3
      %p152 = scmp.ne.s32.totalorder %s147, %s149
      %p153 = scmp.eq.s32.totalorder %s17, 0
      %p154 = por %p152, %p153
      %p155 = scmp.ne.s32.totalorder %s147, %s149
      %p156 = scmp.eq.s32.totalorder %s22, 3
      %p157 = por %p155, %p156
      %p158 = scmp.ne.s32.totalorder %s149, %s150
      %p159 = scmp.eq.s32.totalorder %s22, 0
      %p160 = por %p158, %p159
      %p161 = scmp.ne.s32.totalorder %s149, %s150
      %p162 = scmp.eq.s32.totalorder %s23, 3
      %p163 = por %p161, %p162
      %p165 = scmp.ne.s32.totalorder %s150, %s164
      %p166 = scmp.eq.s32.totalorder %s23, 0
      %p167 = por %p165, %p166
      %s169 = sadd.s32 %s168, 1
      %p172 = scmp.eq.s32.totalorder %s17, 3
      %p173 = scmp.ne.s32.totalorder %s168, %s170
      %p174 = scmp.eq.s32.totalorder %s17, 0
      %p175 = por %p173, %p174
      %p176 = scmp.ne.s32.totalorder %s168, %s170
      %p177 = scmp.eq.s32.totalorder %s22, 3
      %p178 = por %p176, %p177
      %p179 = scmp.ne.s32.totalorder %s170, %s171
      %p180 = scmp.eq.s32.totalorder %s22, 0
      %p181 = por %p179, %p180
      %p182 = scmp.ne.s32.totalorder %s170, %s171
      %p183 = scmp.eq.s32.totalorder %s23, 3
      %p184 = por %p182, %p183
      %p186 = scmp.ne.s32.totalorder %s171, %s185
      %p187 = scmp.eq.s32.totalorder %s23, 0
      %p188 = por %p186, %p187
      %s189 = ssub.s32 %s24, %s36
      %s190 = ssub.s32 %s25, %s32
      %s191 = sor.u32 %s189, %s190
      %p192 = scmp.eq.s32.totalorder %s191, 0
      %s194 = sadd.s32 %s193, 1
      %s195 = scalar_select %p192, %s193, %s194
      %p198 = pneg %p192
      %p199 = scmp.eq.s32.totalorder %s17, 3
      %p200 = por %p198, %p199
      %p201 = scmp.ne.s32.totalorder %s193, %s196
      %p202 = scmp.eq.s32.totalorder %s17, 0
      %p203 = por %p201, %p202
      %p204 = scmp.ne.s32.totalorder %s193, %s196
      %p205 = scmp.eq.s32.totalorder %s22, 3
      %p206 = por %p204, %p205
      %p207 = scmp.ne.s32.totalorder %s196, %s197
      %p208 = scmp.eq.s32.totalorder %s22, 0
      %p209 = por %p207, %p208
      %p210 = scmp.ne.s32.totalorder %s196, %s197
      %p211 = scmp.eq.s32.totalorder %s23, 3
      %p212 = por %p210, %p211
      %p214 = scmp.ne.s32.totalorder %s197, %s213
      %p215 = scmp.eq.s32.totalorder %s23, 0
      %p216 = por %p214, %p215
      %p217 = scmp.le.s32.totalorder 1, %s17
      %p218 = scmp.lt.s32.totalorder %s17, 5
      %p219 = pnand %p217, %p218
      %p220 = pneg %p219
      // Predicated region
      $region9: #{tpu_custom_call.1} parent=5 // pred_check
        _
      $region10: #{tpu_custom_call.1} parent=5 // pred_check_branch
        %222 = sbr.rel (%p219) target = $region12
      $region11: #{tpu_custom_call.1} parent=5 // pred_region
        %s223 = ssub.s32 %s17, 1
        // Predicated region
        $region13: #{tpu_custom_call.1} parent=11 // pred_check
          %p224 = pneg %p76
        $region14: #{tpu_custom_call.1} parent=11 // pred_check_branch
          %226 = sbr.rel (%p224) target = $region16
        $region15: #{tpu_custom_call.1} parent=11 // pred_region
          _
        $region16: #{tpu_custom_call.1} parent=11 // pred_fallthru
          _
        // Predicated region
        $region17: #{tpu_custom_call.1} parent=11 // pred_check
          %p227 = pneg %p97
        $region18: #{tpu_custom_call.1} parent=11 // pred_check_branch
          %229 = sbr.rel (%p227) target = $region20
        $region19: #{tpu_custom_call.1} parent=11 // pred_region
          _
        $region20: #{tpu_custom_call.1} parent=11 // pred_fallthru
          _
        // Predicated region
        $region21: #{tpu_custom_call.1} parent=11 // pred_check
          %p230 = pneg %p118
        $region22: #{tpu_custom_call.1} parent=11 // pred_check_branch
          %232 = sbr.rel (%p230) target = $region24
        $region23: #{tpu_custom_call.1} parent=11 // pred_region
          _
        $region24: #{tpu_custom_call.1} parent=11 // pred_fallthru
          _
        // Predicated region
        $region25: #{tpu_custom_call.1} parent=11 // pred_check
          %p233 = pneg %p139
        $region26: #{tpu_custom_call.1} parent=11 // pred_check_branch
          %235 = sbr.rel (%p233) target = $region28
        $region27: #{tpu_custom_call.1} parent=11 // pred_region
          %237 = vsyncadd [#allocation4], 0
          %s238 = sshll.u32 %s4, 4
          %s239 = int_to_ptr.hbm [resolvable:$true] %s238
          %s240 = sshll.u32 [#allocation3], 4
          %s241 = int_to_ptr.vmem [resolvable:$true] %s240
          %246 = dma.hbm_to_vmem [thread:$0]  %s239, 9216, %s241, [#allocation4], 64, 64, 4
        $region28: #{tpu_custom_call.1} parent=11 // pred_fallthru
          _
        // Predicated region
        $region29: #{tpu_custom_call.1} parent=11 // pred_check
          %p247 = pneg %p160
        $region30: #{tpu_custom_call.1} parent=11 // pred_check_branch
          %249 = sbr.rel (%p247) target = $region32
        $region31: #{tpu_custom_call.1} parent=11 // pred_region
          _
        $region32: #{tpu_custom_call.1} parent=11 // pred_fallthru
          _
        // Predicated region
        $region33: #{tpu_custom_call.1} parent=11 // pred_check
          %p250 = pneg %p181
        $region34: #{tpu_custom_call.1} parent=11 // pred_check_branch
          %252 = sbr.rel (%p250) target = $region36
        $region35: #{tpu_custom_call.1} parent=11 // pred_region
          _
        $region36: #{tpu_custom_call.1} parent=11 // pred_fallthru
          _
      $region12: #{tpu_custom_call.1} parent=5 // pred_fallthru
        _
      %p253 = scmp.lt.s32.totalorder %s17, 4
      // Predicated region
      $region37: #{tpu_custom_call.1} parent=5 // pred_check
        %p254 = pneg %p253
      $region38: #{tpu_custom_call.1} parent=5 // pred_check_branch
        %256 = sbr.rel (%p254) target = $region40
      $region39: #{tpu_custom_call.1} parent=5 // pred_region
        // Predicated region
        $region41: #{tpu_custom_call.1} parent=39 // pred_check
          %p257 = pneg %p49
        $region42: #{tpu_custom_call.1} parent=39 // pred_check_branch
          %259 = sbr.rel (%p257) target = $region44
        $region43: #{tpu_custom_call.1} parent=39 // pred_region
          %p260 = scmp.lt.s32.totalorder %s24, 1
          %s261 = scalar_select %p260, %s24, 1
          %s262 = smul.addr %s261, 2
          %s263 = smul.addr %s262, 8
          %s264 = scalar_lea.vmem %s0, %s263
        $region44: #{tpu_custom_call.1} parent=39 // pred_fallthru
          _
      $region40: #{tpu_custom_call.1} parent=5 // pred_fallthru
        _
      %p265 = scmp.le.s32.totalorder 1, %s17
      %p266 = scmp.lt.s32.totalorder %s17, 5
      %p267 = pnand %p265, %p266
      %p268 = pneg %p267
      // Predicated region
      $region45: #{tpu_custom_call.1} parent=5 // pred_check
        _
      $region46: #{tpu_custom_call.1} parent=5 // pred_check_branch
        %270 = sbr.rel (%p267) target = $region48
      $region47: #{tpu_custom_call.1} parent=5 // pred_region
        %s271 = ssub.s32 %s17, 1
        // Predicated region
        $region49: #{tpu_custom_call.1} parent=47 // pred_check
          %p272 = pneg %p139
        $region50: #{tpu_custom_call.1} parent=47 // pred_check_branch
          %274 = sbr.rel (%p272) target = $region52
        $region51: #{tpu_custom_call.1} parent=47 // pred_region
          %276 = dma.done [#allocation4], 9216
        $region52: #{tpu_custom_call.1} parent=47 // pred_fallthru
          _
        %p277 = scmp.lt.s32.totalorder %s26, 1
        %s278 = scalar_select %p277, %s26, 1
        %s279 = smul.addr %s278, 2
        %s280 = smul.addr %s279, 8
        %s281 = scalar_lea.vmem %s0, %s280
        %p282 = pneg %p55
        %p283 = pneg %p52
        %p284 = pneg %p76
        %p285 = pneg %p73
        %p286 = pneg %p97
        %p287 = pneg %p94
        %p288 = pneg %p118
        %p289 = pneg %p115
        %p290 = pneg %p139
        %p291 = pneg %p136
        %p292 = pneg %p160
        %p293 = pneg %p157
        %p294 = pneg %p181
        %p295 = pneg %p178
        %p296 = pneg %p209
        %p297 = pneg %p206
        %s298 = sand.u32 %s196, 1
        %s299 = scalar_lea.sflag [#allocation5], %s298
        %s300 = sand.u32 %s196, 1
        %s301 = smul.addr %s300, 128
        %s302 = scalar_lea.vmem [#allocation6], %s301
        %p303 = scmp.lt.s32.totalorder %s26, 1
        %s304 = scalar_select %p303, %s26, 1
        %s305 = smul.addr %s304, 2
        %s306 = smul.addr %s305, 8
        %s307 = scalar_lea.vmem %s0, %s306
        %s308 = smul.u32 16, %s27
        %p309 = scmp.eq.s32.totalorder %s27, 0
        // Predicated region
        $region53: #{tpu_custom_call.1} parent=47 // pred_check
          %p310 = pneg %p309
        $region54: #{tpu_custom_call.1} parent=47 // pred_check_branch
          %312 = sbr.rel (%p310) target = $region56
        $region55: #{tpu_custom_call.1} parent=47 // pred_region
          %313 = vst [vmem:[#allocation2] sm:$0xff] 0.0
          %314 = vst [vmem:[#allocation2 + $0x8] sm:$0xff] 0.0
          %315 = vst [vmem:[#allocation2 + $0x10] sm:$0xff] 0.0
          %316 = vst [vmem:[#allocation2 + $0x18] sm:$0xff] 0.0
          %317 = vst [vmem:[#allocation2 + $0x20] sm:$0xff] 0.0
          %318 = vst [vmem:[#allocation2 + $0x28] sm:$0xff] 0.0
          %319 = vst [vmem:[#allocation2 + $0x30] sm:$0xff] 0.0
          %320 = vst [vmem:[#allocation2 + $0x38] sm:$0xff] 0.0
          %321 = vst [vmem:[#allocation2 + $0x40] sm:$0xff] 0.0
          %322 = vst [vmem:[#allocation2 + $0x48] sm:$0xff] 0.0
          %323 = vst [vmem:[#allocation2 + $0x50] sm:$0xff] 0.0
          %324 = vst [vmem:[#allocation2 + $0x58] sm:$0xff] 0.0
          %325 = vst [vmem:[#allocation2 + $0x60] sm:$0xff] 0.0
          %326 = vst [vmem:[#allocation2 + $0x68] sm:$0xff] 0.0
          %327 = vst [vmem:[#allocation2 + $0x70] sm:$0xff] 0.0
          %328 = vst [vmem:[#allocation2 + $0x78] sm:$0xff] 0.0
          %329 = vst [vmem:[#allocation2 + $0x80] sm:$0xff] 0.0
          %330 = vst [vmem:[#allocation2 + $0x88] sm:$0xff] 0.0
          %331 = vst [vmem:[#allocation2 + $0x90] sm:$0xff] 0.0
          %332 = vst [vmem:[#allocation2 + $0x98] sm:$0xff] 0.0
          %333 = vst [vmem:[#allocation2 + $0xa0] sm:$0xff] 0.0
          %334 = vst [vmem:[#allocation2 + $0xa8] sm:$0xff] 0.0
          %335 = vst [vmem:[#allocation2 + $0xb0] sm:$0xff] 0.0
          %336 = vst [vmem:[#allocation2 + $0xb8] sm:$0xff] 0.0
          %337 = vst [vmem:[#allocation2 + $0xc0] sm:$0xff] 0.0
          %338 = vst [vmem:[#allocation2 + $0xc8] sm:$0xff] 0.0
          %339 = vst [vmem:[#allocation2 + $0xd0] sm:$0xff] 0.0
          %340 = vst [vmem:[#allocation2 + $0xd8] sm:$0xff] 0.0
          %341 = vst [vmem:[#allocation2 + $0xe0] sm:$0xff] 0.0
          %342 = vst [vmem:[#allocation2 + $0xe8] sm:$0xff] 0.0
          %343 = vst [vmem:[#allocation2 + $0xf0] sm:$0xff] 0.0
          %344 = vst [vmem:[#allocation2 + $0xf8] sm:$0xff] 0.0
          %s345 = scalar_lea.vmem [#allocation2], 768
          %346 = vst [vmem:[%s345] sm:$0xff] 0.0
          %347 = vst [vmem:[%s345 + $0x8] sm:$0xff] 0.0
          %348 = vst [vmem:[%s345 + $0x10] sm:$0xff] 0.0
          %349 = vst [vmem:[%s345 + $0x18] sm:$0xff] 0.0
          %350 = vst [vmem:[%s345 + $0x20] sm:$0xff] 0.0
          %351 = vst [vmem:[%s345 + $0x28] sm:$0xff] 0.0
          %352 = vst [vmem:[%s345 + $0x30] sm:$0xff] 0.0
          %353 = vst [vmem:[%s345 + $0x38] sm:$0xff] 0.0
          %354 = vst [vmem:[%s345 + $0x40] sm:$0xff] 0.0
          %355 = vst [vmem:[%s345 + $0x48] sm:$0xff] 0.0
          %356 = vst [vmem:[%s345 + $0x50] sm:$0xff] 0.0
          %357 = vst [vmem:[%s345 + $0x58] sm:$0xff] 0.0
          %358 = vst [vmem:[%s345 + $0x60] sm:$0xff] 0.0
          %359 = vst [vmem:[%s345 + $0x68] sm:$0xff] 0.0
          %360 = vst [vmem:[%s345 + $0x70] sm:$0xff] 0.0
          %361 = vst [vmem:[%s345 + $0x78] sm:$0xff] 0.0
          %362 = vst [vmem:[%s345 + $0x80] sm:$0xff] 0.0
          %363 = vst [vmem:[%s345 + $0x88] sm:$0xff] 0.0
          %364 = vst [vmem:[%s345 + $0x90] sm:$0xff] 0.0
          %365 = vst [vmem:[%s345 + $0x98] sm:$0xff] 0.0
          %366 = vst [vmem:[%s345 + $0xa0] sm:$0xff] 0.0
          %367 = vst [vmem:[%s345 + $0xa8] sm:$0xff] 0.0
          %368 = vst [vmem:[%s345 + $0xb0] sm:$0xff] 0.0
          %369 = vst [vmem:[%s345 + $0xb8] sm:$0xff] 0.0
          %370 = vst [vmem:[%s345 + $0xc0] sm:$0xff] 0.0
          %371 = vst [vmem:[%s345 + $0xc8] sm:$0xff] 0.0
          %372 = vst [vmem:[%s345 + $0xd0] sm:$0xff] 0.0
          %373 = vst [vmem:[%s345 + $0xd8] sm:$0xff] 0.0
          %374 = vst [vmem:[%s345 + $0xe0] sm:$0xff] 0.0
          %375 = vst [vmem:[%s345 + $0xe8] sm:$0xff] 0.0
          %376 = vst [vmem:[%s345 + $0xf0] sm:$0xff] 0.0
          %377 = vst [vmem:[%s345 + $0xf8] sm:$0xff] 0.0
          %s378 = scalar_lea.vmem [#allocation2], 256
          %379 = vst [vmem:[%s378] sm:$0xff] 0.0
          %380 = vst [vmem:[%s378 + $0x20] sm:$0xff] 0.0
          %381 = vst [vmem:[%s378 + $0x40] sm:$0xff] 0.0
          %382 = vst [vmem:[%s378 + $0x60] sm:$0xff] 0.0
          %383 = vst [vmem:[%s378 + $0x80] sm:$0xff] 0.0
          %384 = vst [vmem:[%s378 + $0xa0] sm:$0xff] 0.0
          %385 = vst [vmem:[%s378 + $0xc0] sm:$0xff] 0.0
          %386 = vst [vmem:[%s378 + $0xe0] sm:$0xff] 0.0
          %387 = vst [vmem:[%s378 + $0x100] sm:$0xff] 0.0
          %388 = vst [vmem:[%s378 + $0x120] sm:$0xff] 0.0
          %389 = vst [vmem:[%s378 + $0x140] sm:$0xff] 0.0
          %390 = vst [vmem:[%s378 + $0x160] sm:$0xff] 0.0
          %391 = vst [vmem:[%s378 + $0x180] sm:$0xff] 0.0
          %392 = vst [vmem:[%s378 + $0x1a0] sm:$0xff] 0.0
          %393 = vst [vmem:[%s378 + $0x1c0] sm:$0xff] 0.0
          %394 = vst [vmem:[%s378 + $0x1e0] sm:$0xff] 0.0
          %395 = vst [vmem:[%s378 + $0x18] sm:$0xff] 0.0
          %396 = vst [vmem:[%s378 + $0x38] sm:$0xff] 0.0
          %397 = vst [vmem:[%s378 + $0x58] sm:$0xff] 0.0
          %398 = vst [vmem:[%s378 + $0x78] sm:$0xff] 0.0
          %399 = vst [vmem:[%s378 + $0x98] sm:$0xff] 0.0
          %400 = vst [vmem:[%s378 + $0xb8] sm:$0xff] 0.0
          %401 = vst [vmem:[%s378 + $0xd8] sm:$0xff] 0.0
          %402 = vst [vmem:[%s378 + $0xf8] sm:$0xff] 0.0
          %403 = vst [vmem:[%s378 + $0x118] sm:$0xff] 0.0
          %404 = vst [vmem:[%s378 + $0x138] sm:$0xff] 0.0
          %405 = vst [vmem:[%s378 + $0x158] sm:$0xff] 0.0
          %406 = vst [vmem:[%s378 + $0x178] sm:$0xff] 0.0
          %407 = vst [vmem:[%s378 + $0x198] sm:$0xff] 0.0
          %408 = vst [vmem:[%s378 + $0x1b8] sm:$0xff] 0.0
          %409 = vst [vmem:[%s378 + $0x1d8] sm:$0xff] 0.0
          %410 = vst [vmem:[%s378 + $0x1f8] sm:$0xff] 0.0
          %v411 = vld [vmem:[%s1] sm:$0xff]
          %v412 = vld [vmem:[%s1 + $0x8] sm:$0xff]
          %v413 = vld [vmem:[%s1 + $0x10] sm:$0xff]
          %v414 = vld [vmem:[%s1 + $0x18] sm:$0xff]
          %v415 = vld [vmem:[%s1 + $0x20] sm:$0xff]
          %v416 = vld [vmem:[%s1 + $0x28] sm:$0xff]
          %v417 = vld [vmem:[%s1 + $0x30] sm:$0xff]
          %v418 = vld [vmem:[%s1 + $0x38] sm:$0xff]
          %v419 = vld [vmem:[%s1 + $0x40] sm:$0xff]
          %v420 = vld [vmem:[%s1 + $0x48] sm:$0xff]
          %v421 = vld [vmem:[%s1 + $0x50] sm:$0xff]
          %v422 = vld [vmem:[%s1 + $0x58] sm:$0xff]
          %v423 = vld [vmem:[%s1 + $0x60] sm:$0xff]
          %v424 = vld [vmem:[%s1 + $0x68] sm:$0xff]
          %v425 = vld [vmem:[%s1 + $0x70] sm:$0xff]
          %v426 = vld [vmem:[%s1 + $0x78] sm:$0xff]
          %v427 = vld [vmem:[%s2] sm:$0x1]
          %v428 = vld [vmem:[%s3] sm:$0x1]
          loop: start=0, step=1, limit=2
          $region57: #{tpu_custom_call.1} parent=55 // loop_pre_header
            _
          $region58: #{tpu_custom_call.1} parent=55 // loop_header
            %s430 = sphi 0, %s434
            %p431 = scmp.ge.s32.totalorder %s430, 2
          $region59: #{tpu_custom_call.1} parent=55 // loop_header_branch
            %433 = sbr.rel (%p431) target = $region63
          $region60: #{tpu_custom_call.1} parent=55 // loop_body
            %s435 = smul.u32 %s430, 128
            %s436 = sshra.s32 %s435, 7
            %s437 = sand.u32 %s435, 127
            %s438 = smul.addr %s436, 8
            %s439 = scalar_lea.vmem %s307, %s438
            %v440 = vld [vmem:[%s439] sm:$0xff]
            %vm441 = vcmask 64512
            %v443 = vsel %vm441, %v411, 0
            %v446 = vsel %vm441, %v412, 0
            %v449 = vsel %vm441, %v413, 0
            %v452 = vsel %vm441, %v414, 0
            %v455 = vsel %vm441, %v415, 0
            %v458 = vsel %vm441, %v416, 0
            %v461 = vsel %vm441, %v417, 0
            %v464 = vsel %vm441, %v418, 0
            %v467 = vsel %vm441, %v419, 0
            %v470 = vsel %vm441, %v420, 0
            %v473 = vsel %vm441, %v421, 0
            %v476 = vsel %vm441, %v422, 0
            %v479 = vsel %vm441, %v423, 0
            %v482 = vsel %vm441, %v424, 0
            %v485 = vsel %vm441, %v425, 0
            %v488 = vsel %vm441, %v426, 0
            %490 = vmatpush.msra.mxu0 0.0
            %491 = vmatpush.msra.mxu0 0.0
            %492 = vmatpush.msra.mxu0 0.0
            %493 = vmatpush.msra.mxu0 0.0
            %494 = vmatpush.msra.mxu0 0.0
            %495 = vmatpush.msra.mxu0 0.0
            %496 = vmatpush.msra.mxu0 0.0
            %497 = vmatpush.msra.mxu0 0.0
            %498 = vmatpush.msra.mxu0 0.0
            %499 = vmatpush.msra.mxu0 0.0
            %500 = vmatpush.msra.mxu0 0.0
            %501 = vmatpush.msra.mxu0 0.0
            %502 = vmatpush.msra.mxu0 0.0
            %503 = vmatpush.msra.mxu0 0.0
            %504 = vmatpush.msra.mxu0 0.0
            %505 = vmatpush.msra.mxu0 %v440
            %506 = vmatmul.f32.gmra.mxu0 %v443
            %v507 = vpop.f32.mrf.mxu0
            %v508 = vadd.f32 0.0, %v507
            %509 = vmatmul.f32.gmra.mxu0 %v446
            %v510 = vpop.f32.mrf.mxu0
            %v511 = vadd.f32 0.0, %v510
            %512 = vmatmul.f32.gmra.mxu0 %v449
            %v513 = vpop.f32.mrf.mxu0
            %v514 = vadd.f32 0.0, %v513
            %515 = vmatmul.f32.gmra.mxu0 %v452
            %v516 = vpop.f32.mrf.mxu0
            %v517 = vadd.f32 0.0, %v516
            %518 = vmatmul.f32.gmra.mxu0 %v455
            %v519 = vpop.f32.mrf.mxu0
            %v520 = vadd.f32 0.0, %v519
            %521 = vmatmul.f32.gmra.mxu0 %v458
            %v522 = vpop.f32.mrf.mxu0
            %v523 = vadd.f32 0.0, %v522
            %524 = vmatmul.f32.gmra.mxu0 %v461
            %v525 = vpop.f32.mrf.mxu0
            %v526 = vadd.f32 0.0, %v525
            %527 = vmatmul.f32.gmra.mxu0 %v464
            %v528 = vpop.f32.mrf.mxu0
            %v529 = vadd.f32 0.0, %v528
            %530 = vmatmul.f32.gmra.mxu0 %v467
            %v531 = vpop.f32.mrf.mxu0
            %v532 = vadd.f32 0.0, %v531
            %533 = vmatmul.f32.gmra.mxu0 %v470
            %v534 = vpop.f32.mrf.mxu0
            %v535 = vadd.f32 0.0, %v534
            %536 = vmatmul.f32.gmra.mxu0 %v473
            %v537 = vpop.f32.mrf.mxu0
            %v538 = vadd.f32 0.0, %v537
            %539 = vmatmul.f32.gmra.mxu0 %v476
            %v540 = vpop.f32.mrf.mxu0
            %v541 = vadd.f32 0.0, %v540
            %542 = vmatmul.f32.gmra.mxu0 %v479
            %v543 = vpop.f32.mrf.mxu0
            %v544 = vadd.f32 0.0, %v543
            %545 = vmatmul.f32.gmra.mxu0 %v482
            %v546 = vpop.f32.mrf.mxu0
            %v547 = vadd.f32 0.0, %v546
            %548 = vmatmul.f32.gmra.mxu0 %v485
            %v549 = vpop.f32.mrf.mxu0
            %v550 = vadd.f32 0.0, %v549
            %551 = vmatmul.f32.gmra.mxu0 %v488
            %v552 = vpop.f32.mrf.mxu0
            %v553 = vadd.f32 0.0, %v552
            %554 = vdwg.mxu0
            %555 = vxpose.xlu0.b32.start [1/16] %v508, 128
            %556 = vxpose.xlu0.b32.cont [2/16] %v511, 128
            %557 = vxpose.xlu0.b32.cont [3/16] %v514, 128
            %558 = vxpose.xlu0.b32.cont [4/16] %v517, 128
            %559 = vxpose.xlu0.b32.cont [5/16] %v520, 128
            %560 = vxpose.xlu0.b32.cont [6/16] %v523, 128
            %561 = vxpose.xlu0.b32.cont [7/16] %v526, 128
            %562 = vxpose.xlu0.b32.cont [8/16] %v529, 128
            %563 = vxpose.xlu0.b32.cont [9/16] %v532, 128
            %564 = vxpose.xlu0.b32.cont [10/16] %v535, 128
            %565 = vxpose.xlu0.b32.cont [11/16] %v538, 128
            %566 = vxpose.xlu0.b32.cont [12/16] %v541, 128
            %567 = vxpose.xlu0.b32.cont [13/16] %v544, 128
            %568 = vxpose.xlu0.b32.cont [14/16] %v547, 128
            %569 = vxpose.xlu0.b32.cont [15/16] %v550, 128
            %570 = vxpose.xlu0.b32.end [16/16] %v553, 128
            %v571 = vpop.trf.xlu0
            %v572 = vpop.trf.xlu0
            %v573 = vpop.trf.xlu0
            %v574 = vpop.trf.xlu0
            %v575 = vpop.trf.xlu0
            %v576 = vpop.trf.xlu0
            %v577 = vpop.trf.xlu0
            %v578 = vpop.trf.xlu0
            %v579 = vpop.trf.xlu0
            %v580 = vpop.trf.xlu0
            %v581 = vpop.trf.xlu0
            %v582 = vpop.trf.xlu0
            %v583 = vpop.trf.xlu0
            %v584 = vpop.trf.xlu0
            %v585 = vpop.trf.xlu0
            %v586 = vpop.trf.xlu0
            %v588 = vperm.slane %v427, 0
            %v590 = vmul.f32 %v571, %v588
            %v591 = vmul.f32 %v572, %v588
            %v592 = vmul.f32 %v573, %v588
            %v593 = vmul.f32 %v574, %v588
            %v594 = vmul.f32 %v575, %v588
            %v595 = vmul.f32 %v576, %v588
            %v596 = vmul.f32 %v577, %v588
            %v597 = vmul.f32 %v578, %v588
            %v598 = vmul.f32 %v579, %v588
            %v599 = vmul.f32 %v580, %v588
            %v600 = vmul.f32 %v581, %v588
            %v601 = vmul.f32 %v582, %v588
            %v602 = vmul.f32 %v583, %v588
            %v603 = vmul.f32 %v584, %v588
            %v604 = vmul.f32 %v585, %v588
            %v605 = vmul.f32 %v586, %v588
            %v607 = vperm.slane %v428, 0
            %v609 = vadd.f32 %v590, %v607
            %v610 = vadd.f32 %v591, %v607
            %v611 = vadd.f32 %v592, %v607
            %v612 = vadd.f32 %v593, %v607
            %v613 = vadd.f32 %v594, %v607
            %v614 = vadd.f32 %v595, %v607
            %v615 = vadd.f32 %v596, %v607
            %v616 = vadd.f32 %v597, %v607
            %v617 = vadd.f32 %v598, %v607
            %v618 = vadd.f32 %v599, %v607
            %v619 = vadd.f32 %v600, %v607
            %v620 = vadd.f32 %v601, %v607
            %v621 = vadd.f32 %v602, %v607
            %v622 = vadd.f32 %v603, %v607
            %v623 = vadd.f32 %v604, %v607
            %v624 = vadd.f32 %v605, %v607
            %v625 = vmax.f32 %v609, 0.0
            %v626 = vmax.f32 %v610, 0.0
            %v627 = vmax.f32 %v611, 0.0
            %v628 = vmax.f32 %v612, 0.0
            %v629 = vmax.f32 %v613, 0.0
            %v630 = vmax.f32 %v614, 0.0
            %v631 = vmax.f32 %v615, 0.0
            %v632 = vmax.f32 %v616, 0.0
            %v633 = vmax.f32 %v617, 0.0
            %v634 = vmax.f32 %v618, 0.0
            %v635 = vmax.f32 %v619, 0.0
            %v636 = vmax.f32 %v620, 0.0
            %v637 = vmax.f32 %v621, 0.0
            %v638 = vmax.f32 %v622, 0.0
            %v639 = vmax.f32 %v623, 0.0
            %v640 = vmax.f32 %v624, 0.0
            %s641 = smul.u32 %s430, 8
            %s642 = sadd.s32 %s641, 8
            %s643 = smul.u32 %s642, 32
            %s644 = scalar_lea.vmem [#allocation2], %s643
            %645 = vst [vmem:[%s644 + $0x8] sm:$0xff] %v625
            %646 = vst [vmem:[%s644 + $0x10] sm:$0xff] %v626
            %647 = vst [vmem:[%s644 + $0x28] sm:$0xff] %v627
            %648 = vst [vmem:[%s644 + $0x30] sm:$0xff] %v628
            %649 = vst [vmem:[%s644 + $0x48] sm:$0xff] %v629
            %650 = vst [vmem:[%s644 + $0x50] sm:$0xff] %v630
            %651 = vst [vmem:[%s644 + $0x68] sm:$0xff] %v631
            %652 = vst [vmem:[%s644 + $0x70] sm:$0xff] %v632
            %653 = vst [vmem:[%s644 + $0x88] sm:$0xff] %v633
            %654 = vst [vmem:[%s644 + $0x90] sm:$0xff] %v634
            %655 = vst [vmem:[%s644 + $0xa8] sm:$0xff] %v635
            %656 = vst [vmem:[%s644 + $0xb0] sm:$0xff] %v636
            %657 = vst [vmem:[%s644 + $0xc8] sm:$0xff] %v637
            %658 = vst [vmem:[%s644 + $0xd0] sm:$0xff] %v638
            %659 = vst [vmem:[%s644 + $0xe8] sm:$0xff] %v639
            %660 = vst [vmem:[%s644 + $0xf0] sm:$0xff] %v640
          $region61: #{tpu_custom_call.1} parent=55 // loop_footer
            %s434 = sadd.s32 1, %s430
          $region62: #{tpu_custom_call.1} parent=55 // loop_footer_branch
            %429 = sbr.rel target = $region58
          $region63: #{tpu_custom_call.1} parent=55 // loop_exit
            _
        $region56: #{tpu_custom_call.1} parent=47 // pred_fallthru
          _
        %v661 = vld [vmem:[%s5] sm:$0x1]
        %v662 = vld [vmem:[%s6] sm:$0x1]
        %s663 = smul.u32 %s27, 8
        %s664 = smul.u32 %s663, 32
        %s665 = scalar_lea.vmem [#allocation2], %s664
        %v666 = vld [vmem:[%s665] sm:$0xff]
        %v667 = vld [vmem:[%s665 + $0x8] sm:$0xff]
        %v668 = vld [vmem:[%s665 + $0x20] sm:$0xff]
        %v669 = vld [vmem:[%s665 + $0x28] sm:$0xff]
        %v670 = vld [vmem:[%s665 + $0x40] sm:$0xff]
        %v671 = vld [vmem:[%s665 + $0x48] sm:$0xff]
        %v672 = vld [vmem:[%s665 + $0x60] sm:$0xff]
        %v673 = vld [vmem:[%s665 + $0x68] sm:$0xff]
        %v674 = vld [vmem:[%s665 + $0x80] sm:$0xff]
        %v675 = vld [vmem:[%s665 + $0x88] sm:$0xff]
        %v676 = vld [vmem:[%s665 + $0xa0] sm:$0xff]
        %v677 = vld [vmem:[%s665 + $0xa8] sm:$0xff]
        %v678 = vld [vmem:[%s665 + $0xc0] sm:$0xff]
        %v679 = vld [vmem:[%s665 + $0xc8] sm:$0xff]
        %v680 = vld [vmem:[%s665 + $0xe0] sm:$0xff]
        %v681 = vld [vmem:[%s665 + $0xe8] sm:$0xff]
        %v682 = vpack.c.bf16 %v666, %v666
        %v683 = vpack.c.bf16 %v667, %v667
        %v684 = vpack.c.bf16 %v668, %v668
        %v685 = vpack.c.bf16 %v669, %v669
        %v686 = vpack.c.bf16 %v670, %v670
        %v687 = vpack.c.bf16 %v671, %v671
        %v688 = vpack.c.bf16 %v672, %v672
        %v689 = vpack.c.bf16 %v673, %v673
        %v690 = vpack.c.bf16 %v674, %v674
        %v691 = vpack.c.bf16 %v675, %v675
        %v692 = vpack.c.bf16 %v676, %v676
        %v693 = vpack.c.bf16 %v677, %v677
        %v694 = vpack.c.bf16 %v678, %v678
        %v695 = vpack.c.bf16 %v679, %v679
        %v696 = vpack.c.bf16 %v680, %v680
        %v697 = vpack.c.bf16 %v681, %v681
        %v698 = vld [vmem:[%s665 + $0x10] sm:$0xff]
        %v699 = vld [vmem:[%s665 + $0x30] sm:$0xff]
        %v700 = vld [vmem:[%s665 + $0x50] sm:$0xff]
        %v701 = vld [vmem:[%s665 + $0x70] sm:$0xff]
        %v702 = vld [vmem:[%s665 + $0x90] sm:$0xff]
        %v703 = vld [vmem:[%s665 + $0xb0] sm:$0xff]
        %v704 = vld [vmem:[%s665 + $0xd0] sm:$0xff]
        %v705 = vld [vmem:[%s665 + $0xf0] sm:$0xff]
        %v706 = vpack.c.bf16 %v698, %v698
        %v707 = vpack.c.bf16 %v699, %v699
        %v708 = vpack.c.bf16 %v700, %v700
        %v709 = vpack.c.bf16 %v701, %v701
        %v710 = vpack.c.bf16 %v702, %v702
        %v711 = vpack.c.bf16 %v703, %v703
        %v712 = vpack.c.bf16 %v704, %v704
        %v713 = vpack.c.bf16 %v705, %v705
        %v714 = vld [vmem:[%s665 + $0x18] sm:$0xff]
        %v715 = vld [vmem:[%s665 + $0x38] sm:$0xff]
        %v716 = vld [vmem:[%s665 + $0x58] sm:$0xff]
        %v717 = vld [vmem:[%s665 + $0x78] sm:$0xff]
        %v718 = vld [vmem:[%s665 + $0x98] sm:$0xff]
        %v719 = vld [vmem:[%s665 + $0xb8] sm:$0xff]
        %v720 = vld [vmem:[%s665 + $0xd8] sm:$0xff]
        %v721 = vld [vmem:[%s665 + $0xf8] sm:$0xff]
        %v722 = vpack.c.bf16 %v714, %v714
        %v723 = vpack.c.bf16 %v715, %v715
        %v724 = vpack.c.bf16 %v716, %v716
        %v725 = vpack.c.bf16 %v717, %v717
        %v726 = vpack.c.bf16 %v718, %v718
        %v727 = vpack.c.bf16 %v719, %v719
        %v728 = vpack.c.bf16 %v720, %v720
        %v729 = vpack.c.bf16 %v721, %v721
        %v746 = vunpack.c.l.b16 %v682
        %v747 = vunpack.c.l.b16 %v683
        %v748 = vunpack.c.l.b16 %v684
        %v749 = vunpack.c.l.b16 %v685
        %v750 = vunpack.c.l.b16 %v686
        %v751 = vunpack.c.l.b16 %v687
        %v752 = vunpack.c.l.b16 %v688
        %v753 = vunpack.c.l.b16 %v689
        %v754 = vunpack.c.l.b16 %v690
        %v755 = vunpack.c.l.b16 %v691
        %v756 = vunpack.c.l.b16 %v692
        %v757 = vunpack.c.l.b16 %v693
        %v758 = vunpack.c.l.b16 %v694
        %v759 = vunpack.c.l.b16 %v695
        %v760 = vunpack.c.l.b16 %v696
        %v761 = vunpack.c.l.b16 %v697
        %v762 = vpack.c.b16 %v747, %v746
        %v763 = vpack.c.b16 %v749, %v748
        %v764 = vpack.c.b16 %v751, %v750
        %v765 = vpack.c.b16 %v753, %v752
        %v766 = vpack.c.b16 %v755, %v754
        %v767 = vpack.c.b16 %v757, %v756
        %v768 = vpack.c.b16 %v759, %v758
        %v769 = vpack.c.b16 %v761, %v760
        %v786 = vunpack.c.l.b16 %v706
        %v787 = vunpack.c.l.b16 %v707
        %v788 = vunpack.c.l.b16 %v708
        %v789 = vunpack.c.l.b16 %v709
        %v790 = vunpack.c.l.b16 %v710
        %v791 = vunpack.c.l.b16 %v711
        %v792 = vunpack.c.l.b16 %v712
        %v793 = vunpack.c.l.b16 %v713
        %v794 = vpack.c.b16 %v786, %v747
        %v795 = vpack.c.b16 %v787, %v749
        %v796 = vpack.c.b16 %v788, %v751
        %v797 = vpack.c.b16 %v789, %v753
        %v798 = vpack.c.b16 %v790, %v755
        %v799 = vpack.c.b16 %v791, %v757
        %v800 = vpack.c.b16 %v792, %v759
        %v801 = vpack.c.b16 %v793, %v761
        %v818 = vunpack.c.l.b16 %v722
        %v819 = vunpack.c.l.b16 %v723
        %v820 = vunpack.c.l.b16 %v724
        %v821 = vunpack.c.l.b16 %v725
        %v822 = vunpack.c.l.b16 %v726
        %v823 = vunpack.c.l.b16 %v727
        %v824 = vunpack.c.l.b16 %v728
        %v825 = vunpack.c.l.b16 %v729
        %v826 = vpack.c.b16 %v818, %v786
        %v827 = vpack.c.b16 %v819, %v787
        %v828 = vpack.c.b16 %v820, %v788
        %v829 = vpack.c.b16 %v821, %v789
        %v830 = vpack.c.b16 %v822, %v790
        %v831 = vpack.c.b16 %v823, %v791
        %v832 = vpack.c.b16 %v824, %v792
        %v833 = vpack.c.b16 %v825, %v793
        %v842 = vld [vmem:[#allocation3] sm:$0xf]
        %v843 = vld [vmem:[#allocation3 + $0x4] sm:$0xf]
        %v844 = vld [vmem:[#allocation3 + $0x8] sm:$0xf]
        %v845 = vld [vmem:[#allocation3 + $0xc] sm:$0xf]
        %v846 = vld [vmem:[#allocation3 + $0x10] sm:$0xf]
        %v847 = vld [vmem:[#allocation3 + $0x14] sm:$0xf]
        %v848 = vld [vmem:[#allocation3 + $0x18] sm:$0xf]
        %v849 = vld [vmem:[#allocation3 + $0x1c] sm:$0xf]
        %v850 = vld [vmem:[#allocation3 + $0x20] sm:$0xf]
        %v851 = vld [vmem:[#allocation3 + $0x24] sm:$0xf]
        %v852 = vld [vmem:[#allocation3 + $0x28] sm:$0xf]
        %v853 = vld [vmem:[#allocation3 + $0x2c] sm:$0xf]
        %v854 = vld [vmem:[#allocation3 + $0x30] sm:$0xf]
        %v855 = vld [vmem:[#allocation3 + $0x34] sm:$0xf]
        %v856 = vld [vmem:[#allocation3 + $0x38] sm:$0xf]
        %v857 = vld [vmem:[#allocation3 + $0x3c] sm:$0xf]
        %v858 = vld [vmem:[#allocation3 + $0x40] sm:$0xf]
        %v859 = vld [vmem:[#allocation3 + $0x44] sm:$0xf]
        %v860 = vld [vmem:[#allocation3 + $0x48] sm:$0xf]
        %v861 = vld [vmem:[#allocation3 + $0x4c] sm:$0xf]
        %v862 = vld [vmem:[#allocation3 + $0x50] sm:$0xf]
        %v863 = vld [vmem:[#allocation3 + $0x54] sm:$0xf]
        %v864 = vld [vmem:[#allocation3 + $0x58] sm:$0xf]
        %v865 = vld [vmem:[#allocation3 + $0x5c] sm:$0xf]
        %v866 = vld [vmem:[#allocation3 + $0x60] sm:$0xf]
        %v867 = vld [vmem:[#allocation3 + $0x64] sm:$0xf]
        %v868 = vld [vmem:[#allocation3 + $0x68] sm:$0xf]
        %v869 = vld [vmem:[#allocation3 + $0x6c] sm:$0xf]
        %v870 = vld [vmem:[#allocation3 + $0x70] sm:$0xf]
        %v871 = vld [vmem:[#allocation3 + $0x74] sm:$0xf]
        %v872 = vld [vmem:[#allocation3 + $0x78] sm:$0xf]
        %v873 = vld [vmem:[#allocation3 + $0x7c] sm:$0xf]
        %v874 = vld [vmem:[#allocation3 + $0x80] sm:$0xf]
        %v875 = vld [vmem:[#allocation3 + $0x84] sm:$0xf]
        %v876 = vld [vmem:[#allocation3 + $0x88] sm:$0xf]
        %v877 = vld [vmem:[#allocation3 + $0x8c] sm:$0xf]
        %v878 = vld [vmem:[#allocation3 + $0x90] sm:$0xf]
        %v879 = vld [vmem:[#allocation3 + $0x94] sm:$0xf]
        %v880 = vld [vmem:[#allocation3 + $0x98] sm:$0xf]
        %v881 = vld [vmem:[#allocation3 + $0x9c] sm:$0xf]
        %v882 = vld [vmem:[#allocation3 + $0xa0] sm:$0xf]
        %v883 = vld [vmem:[#allocation3 + $0xa4] sm:$0xf]
        %v884 = vld [vmem:[#allocation3 + $0xa8] sm:$0xf]
        %v885 = vld [vmem:[#allocation3 + $0xac] sm:$0xf]
        %v886 = vld [vmem:[#allocation3 + $0xb0] sm:$0xf]
        %v887 = vld [vmem:[#allocation3 + $0xb4] sm:$0xf]
        %v888 = vld [vmem:[#allocation3 + $0xb8] sm:$0xf]
        %v889 = vld [vmem:[#allocation3 + $0xbc] sm:$0xf]
        %s890 = sadd.s32 %s663, 8
        %s891 = smul.u32 %s890, 32
        %s892 = scalar_lea.vmem [#allocation2], %s891
        %v893 = vld [vmem:[%s892] sm:$0xff]
        %v894 = vld [vmem:[%s892 + $0x8] sm:$0xff]
        %v895 = vld [vmem:[%s892 + $0x20] sm:$0xff]
        %v896 = vld [vmem:[%s892 + $0x28] sm:$0xff]
        %v897 = vld [vmem:[%s892 + $0x40] sm:$0xff]
        %v898 = vld [vmem:[%s892 + $0x48] sm:$0xff]
        %v899 = vld [vmem:[%s892 + $0x60] sm:$0xff]
        %v900 = vld [vmem:[%s892 + $0x68] sm:$0xff]
        %v901 = vld [vmem:[%s892 + $0x80] sm:$0xff]
        %v902 = vld [vmem:[%s892 + $0x88] sm:$0xff]
        %v903 = vld [vmem:[%s892 + $0xa0] sm:$0xff]
        %v904 = vld [vmem:[%s892 + $0xa8] sm:$0xff]
        %v905 = vld [vmem:[%s892 + $0xc0] sm:$0xff]
        %v906 = vld [vmem:[%s892 + $0xc8] sm:$0xff]
        %v907 = vld [vmem:[%s892 + $0xe0] sm:$0xff]
        %v908 = vld [vmem:[%s892 + $0xe8] sm:$0xff]
        %v909 = vpack.c.bf16 %v893, %v893
        %v910 = vpack.c.bf16 %v894, %v894
        %v911 = vpack.c.bf16 %v895, %v895
        %v912 = vpack.c.bf16 %v896, %v896
        %v913 = vpack.c.bf16 %v897, %v897
        %v914 = vpack.c.bf16 %v898, %v898
        %v915 = vpack.c.bf16 %v899, %v899
        %v916 = vpack.c.bf16 %v900, %v900
        %v917 = vpack.c.bf16 %v901, %v901
        %v918 = vpack.c.bf16 %v902, %v902
        %v919 = vpack.c.bf16 %v903, %v903
        %v920 = vpack.c.bf16 %v904, %v904
        %v921 = vpack.c.bf16 %v905, %v905
        %v922 = vpack.c.bf16 %v906, %v906
        %v923 = vpack.c.bf16 %v907, %v907
        %v924 = vpack.c.bf16 %v908, %v908
        %v925 = vld [vmem:[%s892 + $0x10] sm:$0xff]
        %v926 = vld [vmem:[%s892 + $0x30] sm:$0xff]
        %v927 = vld [vmem:[%s892 + $0x50] sm:$0xff]
        %v928 = vld [vmem:[%s892 + $0x70] sm:$0xff]
        %v929 = vld [vmem:[%s892 + $0x90] sm:$0xff]
        %v930 = vld [vmem:[%s892 + $0xb0] sm:$0xff]
        %v931 = vld [vmem:[%s892 + $0xd0] sm:$0xff]
        %v932 = vld [vmem:[%s892 + $0xf0] sm:$0xff]
        %v933 = vpack.c.bf16 %v925, %v925
        %v934 = vpack.c.bf16 %v926, %v926
        %v935 = vpack.c.bf16 %v927, %v927
        %v936 = vpack.c.bf16 %v928, %v928
        %v937 = vpack.c.bf16 %v929, %v929
        %v938 = vpack.c.bf16 %v930, %v930
        %v939 = vpack.c.bf16 %v931, %v931
        %v940 = vpack.c.bf16 %v932, %v932
        %v941 = vld [vmem:[%s892 + $0x18] sm:$0xff]
        %v942 = vld [vmem:[%s892 + $0x38] sm:$0xff]
        %v943 = vld [vmem:[%s892 + $0x58] sm:$0xff]
        %v944 = vld [vmem:[%s892 + $0x78] sm:$0xff]
        %v945 = vld [vmem:[%s892 + $0x98] sm:$0xff]
        %v946 = vld [vmem:[%s892 + $0xb8] sm:$0xff]
        %v947 = vld [vmem:[%s892 + $0xd8] sm:$0xff]
        %v948 = vld [vmem:[%s892 + $0xf8] sm:$0xff]
        %v949 = vpack.c.bf16 %v941, %v941
        %v950 = vpack.c.bf16 %v942, %v942
        %v951 = vpack.c.bf16 %v943, %v943
        %v952 = vpack.c.bf16 %v944, %v944
        %v953 = vpack.c.bf16 %v945, %v945
        %v954 = vpack.c.bf16 %v946, %v946
        %v955 = vpack.c.bf16 %v947, %v947
        %v956 = vpack.c.bf16 %v948, %v948
        %v973 = vunpack.c.l.b16 %v909
        %v974 = vunpack.c.l.b16 %v910
        %v975 = vunpack.c.l.b16 %v911
        %v976 = vunpack.c.l.b16 %v912
        %v977 = vunpack.c.l.b16 %v913
        %v978 = vunpack.c.l.b16 %v914
        %v979 = vunpack.c.l.b16 %v915
        %v980 = vunpack.c.l.b16 %v916
        %v981 = vunpack.c.l.b16 %v917
        %v982 = vunpack.c.l.b16 %v918
        %v983 = vunpack.c.l.b16 %v919
        %v984 = vunpack.c.l.b16 %v920
        %v985 = vunpack.c.l.b16 %v921
        %v986 = vunpack.c.l.b16 %v922
        %v987 = vunpack.c.l.b16 %v923
        %v988 = vunpack.c.l.b16 %v924
        %v989 = vpack.c.b16 %v974, %v973
        %v990 = vpack.c.b16 %v976, %v975
        %v991 = vpack.c.b16 %v978, %v977
        %v992 = vpack.c.b16 %v980, %v979
        %v993 = vpack.c.b16 %v982, %v981
        %v994 = vpack.c.b16 %v984, %v983
        %v995 = vpack.c.b16 %v986, %v985
        %v996 = vpack.c.b16 %v988, %v987
        %v1013 = vunpack.c.l.b16 %v933
        %v1014 = vunpack.c.l.b16 %v934
        %v1015 = vunpack.c.l.b16 %v935
        %v1016 = vunpack.c.l.b16 %v936
        %v1017 = vunpack.c.l.b16 %v937
        %v1018 = vunpack.c.l.b16 %v938
        %v1019 = vunpack.c.l.b16 %v939
        %v1020 = vunpack.c.l.b16 %v940
        %v1021 = vpack.c.b16 %v1013, %v974
        %v1022 = vpack.c.b16 %v1014, %v976
        %v1023 = vpack.c.b16 %v1015, %v978
        %v1024 = vpack.c.b16 %v1016, %v980
        %v1025 = vpack.c.b16 %v1017, %v982
        %v1026 = vpack.c.b16 %v1018, %v984
        %v1027 = vpack.c.b16 %v1019, %v986
        %v1028 = vpack.c.b16 %v1020, %v988
        %v1045 = vunpack.c.l.b16 %v949
        %v1046 = vunpack.c.l.b16 %v950
        %v1047 = vunpack.c.l.b16 %v951
        %v1048 = vunpack.c.l.b16 %v952
        %v1049 = vunpack.c.l.b16 %v953
        %v1050 = vunpack.c.l.b16 %v954
        %v1051 = vunpack.c.l.b16 %v955
        %v1052 = vunpack.c.l.b16 %v956
        %v1053 = vpack.c.b16 %v1045, %v1013
        %v1054 = vpack.c.b16 %v1046, %v1014
        %v1055 = vpack.c.b16 %v1047, %v1015
        %v1056 = vpack.c.b16 %v1048, %v1016
        %v1057 = vpack.c.b16 %v1049, %v1017
        %v1058 = vpack.c.b16 %v1050, %v1018
        %v1059 = vpack.c.b16 %v1051, %v1019
        %v1060 = vpack.c.b16 %v1052, %v1020
        %s1069 = scalar_lea.vmem [#allocation3], 192
        %v1070 = vld [vmem:[%s1069] sm:$0xf]
        %v1071 = vld [vmem:[%s1069 + $0x4] sm:$0xf]
        %v1072 = vld [vmem:[%s1069 + $0x8] sm:$0xf]
        %v1073 = vld [vmem:[%s1069 + $0xc] sm:$0xf]
        %v1074 = vld [vmem:[%s1069 + $0x10] sm:$0xf]
        %v1075 = vld [vmem:[%s1069 + $0x14] sm:$0xf]
        %v1076 = vld [vmem:[%s1069 + $0x18] sm:$0xf]
        %v1077 = vld [vmem:[%s1069 + $0x1c] sm:$0xf]
        %v1078 = vld [vmem:[%s1069 + $0x20] sm:$0xf]
        %v1079 = vld [vmem:[%s1069 + $0x24] sm:$0xf]
        %v1080 = vld [vmem:[%s1069 + $0x28] sm:$0xf]
        %v1081 = vld [vmem:[%s1069 + $0x2c] sm:$0xf]
        %v1082 = vld [vmem:[%s1069 + $0x30] sm:$0xf]
        %v1083 = vld [vmem:[%s1069 + $0x34] sm:$0xf]
        %v1084 = vld [vmem:[%s1069 + $0x38] sm:$0xf]
        %v1085 = vld [vmem:[%s1069 + $0x3c] sm:$0xf]
        %v1086 = vld [vmem:[%s1069 + $0x40] sm:$0xf]
        %v1087 = vld [vmem:[%s1069 + $0x44] sm:$0xf]
        %v1088 = vld [vmem:[%s1069 + $0x48] sm:$0xf]
        %v1089 = vld [vmem:[%s1069 + $0x4c] sm:$0xf]
        %v1090 = vld [vmem:[%s1069 + $0x50] sm:$0xf]
        %v1091 = vld [vmem:[%s1069 + $0x54] sm:$0xf]
        %v1092 = vld [vmem:[%s1069 + $0x58] sm:$0xf]
        %v1093 = vld [vmem:[%s1069 + $0x5c] sm:$0xf]
        %v1094 = vld [vmem:[%s1069 + $0x60] sm:$0xf]
        %v1095 = vld [vmem:[%s1069 + $0x64] sm:$0xf]
        %v1096 = vld [vmem:[%s1069 + $0x68] sm:$0xf]
        %v1097 = vld [vmem:[%s1069 + $0x6c] sm:$0xf]
        %v1098 = vld [vmem:[%s1069 + $0x70] sm:$0xf]
        %v1099 = vld [vmem:[%s1069 + $0x74] sm:$0xf]
        %v1100 = vld [vmem:[%s1069 + $0x78] sm:$0xf]
        %v1101 = vld [vmem:[%s1069 + $0x7c] sm:$0xf]
        %v1102 = vld [vmem:[%s1069 + $0x80] sm:$0xf]
        %v1103 = vld [vmem:[%s1069 + $0x84] sm:$0xf]
        %v1104 = vld [vmem:[%s1069 + $0x88] sm:$0xf]
        %v1105 = vld [vmem:[%s1069 + $0x8c] sm:$0xf]
        %v1106 = vld [vmem:[%s1069 + $0x90] sm:$0xf]
        %v1107 = vld [vmem:[%s1069 + $0x94] sm:$0xf]
        %v1108 = vld [vmem:[%s1069 + $0x98] sm:$0xf]
        %v1109 = vld [vmem:[%s1069 + $0x9c] sm:$0xf]
        %v1110 = vld [vmem:[%s1069 + $0xa0] sm:$0xf]
        %v1111 = vld [vmem:[%s1069 + $0xa4] sm:$0xf]
        %v1112 = vld [vmem:[%s1069 + $0xa8] sm:$0xf]
        %v1113 = vld [vmem:[%s1069 + $0xac] sm:$0xf]
        %v1114 = vld [vmem:[%s1069 + $0xb0] sm:$0xf]
        %v1115 = vld [vmem:[%s1069 + $0xb4] sm:$0xf]
        %v1116 = vld [vmem:[%s1069 + $0xb8] sm:$0xf]
        %v1117 = vld [vmem:[%s1069 + $0xbc] sm:$0xf]
        %v1166 = vunpack.c.l.b16 %v1070
        %v1167 = vunpack.c.l.b16 %v1071
        %v1168 = vunpack.c.l.b16 %v1072
        %v1169 = vunpack.c.l.b16 %v1073
        %v1170 = vunpack.c.l.b16 %v1074
        %v1171 = vunpack.c.l.b16 %v1075
        %v1172 = vunpack.c.l.b16 %v1076
        %v1173 = vunpack.c.l.b16 %v1077
        %v1174 = vunpack.c.l.b16 %v1078
        %v1175 = vunpack.c.l.b16 %v1079
        %v1176 = vunpack.c.l.b16 %v1080
        %v1177 = vunpack.c.l.b16 %v1081
        %v1178 = vunpack.c.l.b16 %v1082
        %v1179 = vunpack.c.l.b16 %v1083
        %v1180 = vunpack.c.l.b16 %v1084
        %v1181 = vunpack.c.l.b16 %v1085
        %v1182 = vunpack.c.l.b16 %v1086
        %v1183 = vunpack.c.l.b16 %v1087
        %v1184 = vunpack.c.l.b16 %v1088
        %v1185 = vunpack.c.l.b16 %v1089
        %v1186 = vunpack.c.l.b16 %v1090
        %v1187 = vunpack.c.l.b16 %v1091
        %v1188 = vunpack.c.l.b16 %v1092
        %v1189 = vunpack.c.l.b16 %v1093
        %v1190 = vunpack.c.l.b16 %v1094
        %v1191 = vunpack.c.l.b16 %v1095
        %v1192 = vunpack.c.l.b16 %v1096
        %v1193 = vunpack.c.l.b16 %v1097
        %v1194 = vunpack.c.l.b16 %v1098
        %v1195 = vunpack.c.l.b16 %v1099
        %v1196 = vunpack.c.l.b16 %v1100
        %v1197 = vunpack.c.l.b16 %v1101
        %v1198 = vunpack.c.l.b16 %v1102
        %v1199 = vunpack.c.l.b16 %v1103
        %v1200 = vunpack.c.l.b16 %v1104
        %v1201 = vunpack.c.l.b16 %v1105
        %v1202 = vunpack.c.l.b16 %v1106
        %v1203 = vunpack.c.l.b16 %v1107
        %v1204 = vunpack.c.l.b16 %v1108
        %v1205 = vunpack.c.l.b16 %v1109
        %v1206 = vunpack.c.l.b16 %v1110
        %v1207 = vunpack.c.l.b16 %v1111
        %v1208 = vunpack.c.l.b16 %v1112
        %v1209 = vunpack.c.l.b16 %v1113
        %v1210 = vunpack.c.l.b16 %v1114
        %v1211 = vunpack.c.l.b16 %v1115
        %v1212 = vunpack.c.l.b16 %v1116
        %v1213 = vunpack.c.l.b16 %v1117
        %v1214 = vpack.c.b16 %v1167, %v1166
        %v1215 = vpack.c.b16 %v1169, %v1168
        %v1216 = vpack.c.b16 %v1171, %v1170
        %v1217 = vpack.c.b16 %v1173, %v1172
        %v1218 = vpack.c.b16 %v1175, %v1174
        %v1219 = vpack.c.b16 %v1177, %v1176
        %v1220 = vpack.c.b16 %v1179, %v1178
        %v1221 = vpack.c.b16 %v1181, %v1180
        %v1222 = vpack.c.b16 %v1183, %v1182
        %v1223 = vpack.c.b16 %v1185, %v1184
        %v1224 = vpack.c.b16 %v1187, %v1186
        %v1225 = vpack.c.b16 %v1189, %v1188
        %v1226 = vpack.c.b16 %v1191, %v1190
        %v1227 = vpack.c.b16 %v1193, %v1192
        %v1228 = vpack.c.b16 %v1195, %v1194
        %v1229 = vpack.c.b16 %v1197, %v1196
        %v1230 = vpack.c.b16 %v1199, %v1198
        %v1231 = vpack.c.b16 %v1201, %v1200
        %v1232 = vpack.c.b16 %v1203, %v1202
        %v1233 = vpack.c.b16 %v1205, %v1204
        %v1234 = vpack.c.b16 %v1207, %v1206
        %v1235 = vpack.c.b16 %v1209, %v1208
        %v1236 = vpack.c.b16 %v1211, %v1210
        %v1237 = vpack.c.b16 %v1213, %v1212
        %1262 = vmatpush.bf16.msra.mxu0 %v1221
        %1263 = vmatpush.bf16.msra.mxu0 %v1220
        %1264 = vmatpush.bf16.msra.mxu0 %v1219
        %1265 = vmatpush.bf16.msra.mxu0 %v1218
        %1266 = vmatpush.bf16.msra.mxu0 %v1217
        %1267 = vmatpush.bf16.msra.mxu0 %v1216
        %1268 = vmatpush.bf16.msra.mxu0 %v1215
        %1269 = vmatpush.bf16.msra.mxu0 %v1214
        %1270 = vmatmul.bf16.gmra.mxu0 %v989
        %v1271 = vpop.f32.mrf.mxu0
        %v1272 = vadd.f32 0.0, %v1271
        %v1273 = vpop.f32.mrf.mxu0
        %v1274 = vadd.f32 0.0, %v1273
        %1275 = vmatmul.bf16.gmra.mxu0 %v990
        %v1276 = vpop.f32.mrf.mxu0
        %v1277 = vadd.f32 0.0, %v1276
        %v1278 = vpop.f32.mrf.mxu0
        %v1279 = vadd.f32 0.0, %v1278
        %1280 = vmatmul.bf16.gmra.mxu0 %v991
        %v1281 = vpop.f32.mrf.mxu0
        %v1282 = vadd.f32 0.0, %v1281
        %v1283 = vpop.f32.mrf.mxu0
        %v1284 = vadd.f32 0.0, %v1283
        %1285 = vmatmul.bf16.gmra.mxu0 %v992
        %v1286 = vpop.f32.mrf.mxu0
        %v1287 = vadd.f32 0.0, %v1286
        %v1288 = vpop.f32.mrf.mxu0
        %v1289 = vadd.f32 0.0, %v1288
        %1290 = vmatmul.bf16.gmra.mxu0 %v993
        %v1291 = vpop.f32.mrf.mxu0
        %v1292 = vadd.f32 0.0, %v1291
        %v1293 = vpop.f32.mrf.mxu0
        %v1294 = vadd.f32 0.0, %v1293
        %1295 = vmatmul.bf16.gmra.mxu0 %v994
        %v1296 = vpop.f32.mrf.mxu0
        %v1297 = vadd.f32 0.0, %v1296
        %v1298 = vpop.f32.mrf.mxu0
        %v1299 = vadd.f32 0.0, %v1298
        %1300 = vmatmul.bf16.gmra.mxu0 %v995
        %v1301 = vpop.f32.mrf.mxu0
        %v1302 = vadd.f32 0.0, %v1301
        %v1303 = vpop.f32.mrf.mxu0
        %v1304 = vadd.f32 0.0, %v1303
        %1305 = vmatmul.bf16.gmra.mxu0 %v996
        %v1306 = vpop.f32.mrf.mxu0
        %v1307 = vadd.f32 0.0, %v1306
        %v1308 = vpop.f32.mrf.mxu0
        %v1309 = vadd.f32 0.0, %v1308
        %1310 = vdwg.mxu0
        %1311 = vmatpush.bf16.msra.mxu0 %v1229
        %1312 = vmatpush.bf16.msra.mxu0 %v1228
        %1313 = vmatpush.bf16.msra.mxu0 %v1227
        %1314 = vmatpush.bf16.msra.mxu0 %v1226
        %1315 = vmatpush.bf16.msra.mxu0 %v1225
        %1316 = vmatpush.bf16.msra.mxu0 %v1224
        %1317 = vmatpush.bf16.msra.mxu0 %v1223
        %1318 = vmatpush.bf16.msra.mxu0 %v1222
        %1319 = vmatmul.bf16.gmra.mxu0 %v1021
        %v1320 = vpop.f32.mrf.mxu0
        %v1321 = vadd.f32 %v1272, %v1320
        %v1322 = vpop.f32.mrf.mxu0
        %v1323 = vadd.f32 %v1274, %v1322
        %1324 = vmatmul.bf16.gmra.mxu0 %v1022
        %v1325 = vpop.f32.mrf.mxu0
        %v1326 = vadd.f32 %v1277, %v1325
        %v1327 = vpop.f32.mrf.mxu0
        %v1328 = vadd.f32 %v1279, %v1327
        %1329 = vmatmul.bf16.gmra.mxu0 %v1023
        %v1330 = vpop.f32.mrf.mxu0
        %v1331 = vadd.f32 %v1282, %v1330
        %v1332 = vpop.f32.mrf.mxu0
        %v1333 = vadd.f32 %v1284, %v1332
        %1334 = vmatmul.bf16.gmra.mxu0 %v1024
        %v1335 = vpop.f32.mrf.mxu0
        %v1336 = vadd.f32 %v1287, %v1335
        %v1337 = vpop.f32.mrf.mxu0
        %v1338 = vadd.f32 %v1289, %v1337
        %1339 = vmatmul.bf16.gmra.mxu0 %v1025
        %v1340 = vpop.f32.mrf.mxu0
        %v1341 = vadd.f32 %v1292, %v1340
        %v1342 = vpop.f32.mrf.mxu0
        %v1343 = vadd.f32 %v1294, %v1342
        %1344 = vmatmul.bf16.gmra.mxu0 %v1026
        %v1345 = vpop.f32.mrf.mxu0
        %v1346 = vadd.f32 %v1297, %v1345
        %v1347 = vpop.f32.mrf.mxu0
        %v1348 = vadd.f32 %v1299, %v1347
        %1349 = vmatmul.bf16.gmra.mxu0 %v1027
        %v1350 = vpop.f32.mrf.mxu0
        %v1351 = vadd.f32 %v1302, %v1350
        %v1352 = vpop.f32.mrf.mxu0
        %v1353 = vadd.f32 %v1304, %v1352
        %1354 = vmatmul.bf16.gmra.mxu0 %v1028
        %v1355 = vpop.f32.mrf.mxu0
        %v1356 = vadd.f32 %v1307, %v1355
        %v1357 = vpop.f32.mrf.mxu0
        %v1358 = vadd.f32 %v1309, %v1357
        %1359 = vdwg.mxu0
        %1360 = vmatpush.bf16.msra.mxu0 %v1237
        %1361 = vmatpush.bf16.msra.mxu0 %v1236
        %1362 = vmatpush.bf16.msra.mxu0 %v1235
        %1363 = vmatpush.bf16.msra.mxu0 %v1234
        %1364 = vmatpush.bf16.msra.mxu0 %v1233
        %1365 = vmatpush.bf16.msra.mxu0 %v1232
        %1366 = vmatpush.bf16.msra.mxu0 %v1231
        %1367 = vmatpush.bf16.msra.mxu0 %v1230
        %1368 = vmatmul.bf16.gmra.mxu0 %v1053
        %v1369 = vpop.f32.mrf.mxu0
        %v1370 = vadd.f32 %v1321, %v1369
        %v1371 = vpop.f32.mrf.mxu0
        %v1372 = vadd.f32 %v1323, %v1371
        %1373 = vmatmul.bf16.gmra.mxu0 %v1054
        %v1374 = vpop.f32.mrf.mxu0
        %v1375 = vadd.f32 %v1326, %v1374
        %v1376 = vpop.f32.mrf.mxu0
        %v1377 = vadd.f32 %v1328, %v1376
        %1378 = vmatmul.bf16.gmra.mxu0 %v1055
        %v1379 = vpop.f32.mrf.mxu0
        %v1380 = vadd.f32 %v1331, %v1379
        %v1381 = vpop.f32.mrf.mxu0
        %v1382 = vadd.f32 %v1333, %v1381
        %1383 = vmatmul.bf16.gmra.mxu0 %v1056
        %v1384 = vpop.f32.mrf.mxu0
        %v1385 = vadd.f32 %v1336, %v1384
        %v1386 = vpop.f32.mrf.mxu0
        %v1387 = vadd.f32 %v1338, %v1386
        %1388 = vmatmul.bf16.gmra.mxu0 %v1057
        %v1389 = vpop.f32.mrf.mxu0
        %v1390 = vadd.f32 %v1341, %v1389
        %v1391 = vpop.f32.mrf.mxu0
        %v1392 = vadd.f32 %v1343, %v1391
        %1393 = vmatmul.bf16.gmra.mxu0 %v1058
        %v1394 = vpop.f32.mrf.mxu0
        %v1395 = vadd.f32 %v1346, %v1394
        %v1396 = vpop.f32.mrf.mxu0
        %v1397 = vadd.f32 %v1348, %v1396
        %1398 = vmatmul.bf16.gmra.mxu0 %v1059
        %v1399 = vpop.f32.mrf.mxu0
        %v1400 = vadd.f32 %v1351, %v1399
        %v1401 = vpop.f32.mrf.mxu0
        %v1402 = vadd.f32 %v1353, %v1401
        %1403 = vmatmul.bf16.gmra.mxu0 %v1060
        %v1404 = vpop.f32.mrf.mxu0
        %v1405 = vadd.f32 %v1356, %v1404
        %v1406 = vpop.f32.mrf.mxu0
        %v1407 = vadd.f32 %v1358, %v1406
        %1408 = vdwg.mxu0
        %v1457 = vunpack.c.l.b16 %v842
        %v1458 = vunpack.c.l.b16 %v843
        %v1459 = vunpack.c.l.b16 %v844
        %v1460 = vunpack.c.l.b16 %v845
        %v1461 = vunpack.c.l.b16 %v846
        %v1462 = vunpack.c.l.b16 %v847
        %v1463 = vunpack.c.l.b16 %v848
        %v1464 = vunpack.c.l.b16 %v849
        %v1465 = vunpack.c.l.b16 %v850
        %v1466 = vunpack.c.l.b16 %v851
        %v1467 = vunpack.c.l.b16 %v852
        %v1468 = vunpack.c.l.b16 %v853
        %v1469 = vunpack.c.l.b16 %v854
        %v1470 = vunpack.c.l.b16 %v855
        %v1471 = vunpack.c.l.b16 %v856
        %v1472 = vunpack.c.l.b16 %v857
        %v1473 = vunpack.c.l.b16 %v858
        %v1474 = vunpack.c.l.b16 %v859
        %v1475 = vunpack.c.l.b16 %v860
        %v1476 = vunpack.c.l.b16 %v861
        %v1477 = vunpack.c.l.b16 %v862
        %v1478 = vunpack.c.l.b16 %v863
        %v1479 = vunpack.c.l.b16 %v864
        %v1480 = vunpack.c.l.b16 %v865
        %v1481 = vunpack.c.l.b16 %v866
        %v1482 = vunpack.c.l.b16 %v867
        %v1483 = vunpack.c.l.b16 %v868
        %v1484 = vunpack.c.l.b16 %v869
        %v1485 = vunpack.c.l.b16 %v870
        %v1486 = vunpack.c.l.b16 %v871
        %v1487 = vunpack.c.l.b16 %v872
        %v1488 = vunpack.c.l.b16 %v873
        %v1489 = vunpack.c.l.b16 %v874
        %v1490 = vunpack.c.l.b16 %v875
        %v1491 = vunpack.c.l.b16 %v876
        %v1492 = vunpack.c.l.b16 %v877
        %v1493 = vunpack.c.l.b16 %v878
        %v1494 = vunpack.c.l.b16 %v879
        %v1495 = vunpack.c.l.b16 %v880
        %v1496 = vunpack.c.l.b16 %v881
        %v1497 = vunpack.c.l.b16 %v882
        %v1498 = vunpack.c.l.b16 %v883
        %v1499 = vunpack.c.l.b16 %v884
        %v1500 = vunpack.c.l.b16 %v885
        %v1501 = vunpack.c.l.b16 %v886
        %v1502 = vunpack.c.l.b16 %v887
        %v1503 = vunpack.c.l.b16 %v888
        %v1504 = vunpack.c.l.b16 %v889
        %v1505 = vpack.c.b16 %v1458, %v1457
        %v1506 = vpack.c.b16 %v1460, %v1459
        %v1507 = vpack.c.b16 %v1462, %v1461
        %v1508 = vpack.c.b16 %v1464, %v1463
        %v1509 = vpack.c.b16 %v1466, %v1465
        %v1510 = vpack.c.b16 %v1468, %v1467
        %v1511 = vpack.c.b16 %v1470, %v1469
        %v1512 = vpack.c.b16 %v1472, %v1471
        %v1513 = vpack.c.b16 %v1474, %v1473
        %v1514 = vpack.c.b16 %v1476, %v1475
        %v1515 = vpack.c.b16 %v1478, %v1477
        %v1516 = vpack.c.b16 %v1480, %v1479
        %v1517 = vpack.c.b16 %v1482, %v1481
        %v1518 = vpack.c.b16 %v1484, %v1483
        %v1519 = vpack.c.b16 %v1486, %v1485
        %v1520 = vpack.c.b16 %v1488, %v1487
        %v1521 = vpack.c.b16 %v1490, %v1489
        %v1522 = vpack.c.b16 %v1492, %v1491
        %v1523 = vpack.c.b16 %v1494, %v1493
        %v1524 = vpack.c.b16 %v1496, %v1495
        %v1525 = vpack.c.b16 %v1498, %v1497
        %v1526 = vpack.c.b16 %v1500, %v1499
        %v1527 = vpack.c.b16 %v1502, %v1501
        %v1528 = vpack.c.b16 %v1504, %v1503
        %1553 = vmatpush.bf16.msra.mxu0 %v1512
        %1554 = vmatpush.bf16.msra.mxu0 %v1511
        %1555 = vmatpush.bf16.msra.mxu0 %v1510
        %1556 = vmatpush.bf16.msra.mxu0 %v1509
        %1557 = vmatpush.bf16.msra.mxu0 %v1508
        %1558 = vmatpush.bf16.msra.mxu0 %v1507
        %1559 = vmatpush.bf16.msra.mxu0 %v1506
        %1560 = vmatpush.bf16.msra.mxu0 %v1505
        %1561 = vmatmul.bf16.gmra.mxu0 %v762
        %v1562 = vpop.f32.mrf.mxu0
        %v1563 = vadd.f32 %v1370, %v1562
        %v1564 = vpop.f32.mrf.mxu0
        %v1565 = vadd.f32 %v1372, %v1564
        %1566 = vmatmul.bf16.gmra.mxu0 %v763
        %v1567 = vpop.f32.mrf.mxu0
        %v1568 = vadd.f32 %v1375, %v1567
        %v1569 = vpop.f32.mrf.mxu0
        %v1570 = vadd.f32 %v1377, %v1569
        %1571 = vmatmul.bf16.gmra.mxu0 %v764
        %v1572 = vpop.f32.mrf.mxu0
        %v1573 = vadd.f32 %v1380, %v1572
        %v1574 = vpop.f32.mrf.mxu0
        %v1575 = vadd.f32 %v1382, %v1574
        %1576 = vmatmul.bf16.gmra.mxu0 %v765
        %v1577 = vpop.f32.mrf.mxu0
        %v1578 = vadd.f32 %v1385, %v1577
        %v1579 = vpop.f32.mrf.mxu0
        %v1580 = vadd.f32 %v1387, %v1579
        %1581 = vmatmul.bf16.gmra.mxu0 %v766
        %v1582 = vpop.f32.mrf.mxu0
        %v1583 = vadd.f32 %v1390, %v1582
        %v1584 = vpop.f32.mrf.mxu0
        %v1585 = vadd.f32 %v1392, %v1584
        %1586 = vmatmul.bf16.gmra.mxu0 %v767
        %v1587 = vpop.f32.mrf.mxu0
        %v1588 = vadd.f32 %v1395, %v1587
        %v1589 = vpop.f32.mrf.mxu0
        %v1590 = vadd.f32 %v1397, %v1589
        %1591 = vmatmul.bf16.gmra.mxu0 %v768
        %v1592 = vpop.f32.mrf.mxu0
        %v1593 = vadd.f32 %v1400, %v1592
        %v1594 = vpop.f32.mrf.mxu0
        %v1595 = vadd.f32 %v1402, %v1594
        %1596 = vmatmul.bf16.gmra.mxu0 %v769
        %v1597 = vpop.f32.mrf.mxu0
        %v1598 = vadd.f32 %v1405, %v1597
        %v1599 = vpop.f32.mrf.mxu0
        %v1600 = vadd.f32 %v1407, %v1599
        %1601 = vdwg.mxu0
        %1602 = vmatpush.bf16.msra.mxu0 %v1520
        %1603 = vmatpush.bf16.msra.mxu0 %v1519
        %1604 = vmatpush.bf16.msra.mxu0 %v1518
        %1605 = vmatpush.bf16.msra.mxu0 %v1517
        %1606 = vmatpush.bf16.msra.mxu0 %v1516
        %1607 = vmatpush.bf16.msra.mxu0 %v1515
        %1608 = vmatpush.bf16.msra.mxu0 %v1514
        %1609 = vmatpush.bf16.msra.mxu0 %v1513
        %1610 = vmatmul.bf16.gmra.mxu0 %v794
        %v1611 = vpop.f32.mrf.mxu0
        %v1612 = vadd.f32 %v1563, %v1611
        %v1613 = vpop.f32.mrf.mxu0
        %v1614 = vadd.f32 %v1565, %v1613
        %1615 = vmatmul.bf16.gmra.mxu0 %v795
        %v1616 = vpop.f32.mrf.mxu0
        %v1617 = vadd.f32 %v1568, %v1616
        %v1618 = vpop.f32.mrf.mxu0
        %v1619 = vadd.f32 %v1570, %v1618
        %1620 = vmatmul.bf16.gmra.mxu0 %v796
        %v1621 = vpop.f32.mrf.mxu0
        %v1622 = vadd.f32 %v1573, %v1621
        %v1623 = vpop.f32.mrf.mxu0
        %v1624 = vadd.f32 %v1575, %v1623
        %1625 = vmatmul.bf16.gmra.mxu0 %v797
        %v1626 = vpop.f32.mrf.mxu0
        %v1627 = vadd.f32 %v1578, %v1626
        %v1628 = vpop.f32.mrf.mxu0
        %v1629 = vadd.f32 %v1580, %v1628
        %1630 = vmatmul.bf16.gmra.mxu0 %v798
        %v1631 = vpop.f32.mrf.mxu0
        %v1632 = vadd.f32 %v1583, %v1631
        %v1633 = vpop.f32.mrf.mxu0
        %v1634 = vadd.f32 %v1585, %v1633
        %1635 = vmatmul.bf16.gmra.mxu0 %v799
        %v1636 = vpop.f32.mrf.mxu0
        %v1637 = vadd.f32 %v1588, %v1636
        %v1638 = vpop.f32.mrf.mxu0
        %v1639 = vadd.f32 %v1590, %v1638
        %1640 = vmatmul.bf16.gmra.mxu0 %v800
        %v1641 = vpop.f32.mrf.mxu0
        %v1642 = vadd.f32 %v1593, %v1641
        %v1643 = vpop.f32.mrf.mxu0
        %v1644 = vadd.f32 %v1595, %v1643
        %1645 = vmatmul.bf16.gmra.mxu0 %v801
        %v1646 = vpop.f32.mrf.mxu0
        %v1647 = vadd.f32 %v1598, %v1646
        %v1648 = vpop.f32.mrf.mxu0
        %v1649 = vadd.f32 %v1600, %v1648
        %1650 = vdwg.mxu0
        %1651 = vmatpush.bf16.msra.mxu0 %v1528
        %1652 = vmatpush.bf16.msra.mxu0 %v1527
        %1653 = vmatpush.bf16.msra.mxu0 %v1526
        %1654 = vmatpush.bf16.msra.mxu0 %v1525
        %1655 = vmatpush.bf16.msra.mxu0 %v1524
        %1656 = vmatpush.bf16.msra.mxu0 %v1523
        %1657 = vmatpush.bf16.msra.mxu0 %v1522
        %1658 = vmatpush.bf16.msra.mxu0 %v1521
        %1659 = vmatmul.bf16.gmra.mxu0 %v826
        %v1660 = vpop.f32.mrf.mxu0
        %v1661 = vadd.f32 %v1612, %v1660
        %v1662 = vpop.f32.mrf.mxu0
        %v1663 = vadd.f32 %v1614, %v1662
        %1664 = vmatmul.bf16.gmra.mxu0 %v827
        %v1665 = vpop.f32.mrf.mxu0
        %v1666 = vadd.f32 %v1617, %v1665
        %v1667 = vpop.f32.mrf.mxu0
        %v1668 = vadd.f32 %v1619, %v1667
        %1669 = vmatmul.bf16.gmra.mxu0 %v828
        %v1670 = vpop.f32.mrf.mxu0
        %v1671 = vadd.f32 %v1622, %v1670
        %v1672 = vpop.f32.mrf.mxu0
        %v1673 = vadd.f32 %v1624, %v1672
        %1674 = vmatmul.bf16.gmra.mxu0 %v829
        %v1675 = vpop.f32.mrf.mxu0
        %v1676 = vadd.f32 %v1627, %v1675
        %v1677 = vpop.f32.mrf.mxu0
        %v1678 = vadd.f32 %v1629, %v1677
        %1679 = vmatmul.bf16.gmra.mxu0 %v830
        %v1680 = vpop.f32.mrf.mxu0
        %v1681 = vadd.f32 %v1632, %v1680
        %v1682 = vpop.f32.mrf.mxu0
        %v1683 = vadd.f32 %v1634, %v1682
        %1684 = vmatmul.bf16.gmra.mxu0 %v831
        %v1685 = vpop.f32.mrf.mxu0
        %v1686 = vadd.f32 %v1637, %v1685
        %v1687 = vpop.f32.mrf.mxu0
        %v1688 = vadd.f32 %v1639, %v1687
        %1689 = vmatmul.bf16.gmra.mxu0 %v832
        %v1690 = vpop.f32.mrf.mxu0
        %v1691 = vadd.f32 %v1642, %v1690
        %v1692 = vpop.f32.mrf.mxu0
        %v1693 = vadd.f32 %v1644, %v1692
        %1694 = vmatmul.bf16.gmra.mxu0 %v833
        %v1695 = vpop.f32.mrf.mxu0
        %v1696 = vadd.f32 %v1647, %v1695
        %v1697 = vpop.f32.mrf.mxu0
        %v1698 = vadd.f32 %v1649, %v1697
        %1699 = vdwg.mxu0
        %s1700 = sadd.s32 %s663, 16
        %s1701 = smul.u32 %s1700, 32
        %s1702 = scalar_lea.vmem [#allocation2], %s1701
        %v1703 = vld [vmem:[%s1702] sm:$0xff]
        %v1704 = vld [vmem:[%s1702 + $0x8] sm:$0xff]
        %v1705 = vld [vmem:[%s1702 + $0x20] sm:$0xff]
        %v1706 = vld [vmem:[%s1702 + $0x28] sm:$0xff]
        %v1707 = vld [vmem:[%s1702 + $0x40] sm:$0xff]
        %v1708 = vld [vmem:[%s1702 + $0x48] sm:$0xff]
        %v1709 = vld [vmem:[%s1702 + $0x60] sm:$0xff]
        %v1710 = vld [vmem:[%s1702 + $0x68] sm:$0xff]
        %v1711 = vld [vmem:[%s1702 + $0x80] sm:$0xff]
        %v1712 = vld [vmem:[%s1702 + $0x88] sm:$0xff]
        %v1713 = vld [vmem:[%s1702 + $0xa0] sm:$0xff]
        %v1714 = vld [vmem:[%s1702 + $0xa8] sm:$0xff]
        %v1715 = vld [vmem:[%s1702 + $0xc0] sm:$0xff]
        %v1716 = vld [vmem:[%s1702 + $0xc8] sm:$0xff]
        %v1717 = vld [vmem:[%s1702 + $0xe0] sm:$0xff]
        %v1718 = vld [vmem:[%s1702 + $0xe8] sm:$0xff]
        %v1719 = vpack.c.bf16 %v1703, %v1703
        %v1720 = vpack.c.bf16 %v1704, %v1704
        %v1721 = vpack.c.bf16 %v1705, %v1705
        %v1722 = vpack.c.bf16 %v1706, %v1706
        %v1723 = vpack.c.bf16 %v1707, %v1707
        %v1724 = vpack.c.bf16 %v1708, %v1708
        %v1725 = vpack.c.bf16 %v1709, %v1709
        %v1726 = vpack.c.bf16 %v1710, %v1710
        %v1727 = vpack.c.bf16 %v1711, %v1711
        %v1728 = vpack.c.bf16 %v1712, %v1712
        %v1729 = vpack.c.bf16 %v1713, %v1713
        %v1730 = vpack.c.bf16 %v1714, %v1714
        %v1731 = vpack.c.bf16 %v1715, %v1715
        %v1732 = vpack.c.bf16 %v1716, %v1716
        %v1733 = vpack.c.bf16 %v1717, %v1717
        %v1734 = vpack.c.bf16 %v1718, %v1718
        %v1735 = vld [vmem:[%s1702 + $0x10] sm:$0xff]
        %v1736 = vld [vmem:[%s1702 + $0x30] sm:$0xff]
        %v1737 = vld [vmem:[%s1702 + $0x50] sm:$0xff]
        %v1738 = vld [vmem:[%s1702 + $0x70] sm:$0xff]
        %v1739 = vld [vmem:[%s1702 + $0x90] sm:$0xff]
        %v1740 = vld [vmem:[%s1702 + $0xb0] sm:$0xff]
        %v1741 = vld [vmem:[%s1702 + $0xd0] sm:$0xff]
        %v1742 = vld [vmem:[%s1702 + $0xf0] sm:$0xff]
        %v1743 = vpack.c.bf16 %v1735, %v1735
        %v1744 = vpack.c.bf16 %v1736, %v1736
        %v1745 = vpack.c.bf16 %v1737, %v1737
        %v1746 = vpack.c.bf16 %v1738, %v1738
        %v1747 = vpack.c.bf16 %v1739, %v1739
        %v1748 = vpack.c.bf16 %v1740, %v1740
        %v1749 = vpack.c.bf16 %v1741, %v1741
        %v1750 = vpack.c.bf16 %v1742, %v1742
        %v1751 = vld [vmem:[%s1702 + $0x18] sm:$0xff]
        %v1752 = vld [vmem:[%s1702 + $0x38] sm:$0xff]
        %v1753 = vld [vmem:[%s1702 + $0x58] sm:$0xff]
        %v1754 = vld [vmem:[%s1702 + $0x78] sm:$0xff]
        %v1755 = vld [vmem:[%s1702 + $0x98] sm:$0xff]
        %v1756 = vld [vmem:[%s1702 + $0xb8] sm:$0xff]
        %v1757 = vld [vmem:[%s1702 + $0xd8] sm:$0xff]
        %v1758 = vld [vmem:[%s1702 + $0xf8] sm:$0xff]
        %v1759 = vpack.c.bf16 %v1751, %v1751
        %v1760 = vpack.c.bf16 %v1752, %v1752
        %v1761 = vpack.c.bf16 %v1753, %v1753
        %v1762 = vpack.c.bf16 %v1754, %v1754
        %v1763 = vpack.c.bf16 %v1755, %v1755
        %v1764 = vpack.c.bf16 %v1756, %v1756
        %v1765 = vpack.c.bf16 %v1757, %v1757
        %v1766 = vpack.c.bf16 %v1758, %v1758
        %v1783 = vunpack.c.l.b16 %v1719
        %v1784 = vunpack.c.l.b16 %v1720
        %v1785 = vunpack.c.l.b16 %v1721
        %v1786 = vunpack.c.l.b16 %v1722
        %v1787 = vunpack.c.l.b16 %v1723
        %v1788 = vunpack.c.l.b16 %v1724
        %v1789 = vunpack.c.l.b16 %v1725
        %v1790 = vunpack.c.l.b16 %v1726
        %v1791 = vunpack.c.l.b16 %v1727
        %v1792 = vunpack.c.l.b16 %v1728
        %v1793 = vunpack.c.l.b16 %v1729
        %v1794 = vunpack.c.l.b16 %v1730
        %v1795 = vunpack.c.l.b16 %v1731
        %v1796 = vunpack.c.l.b16 %v1732
        %v1797 = vunpack.c.l.b16 %v1733
        %v1798 = vunpack.c.l.b16 %v1734
        %v1799 = vpack.c.b16 %v1784, %v1783
        %v1800 = vpack.c.b16 %v1786, %v1785
        %v1801 = vpack.c.b16 %v1788, %v1787
        %v1802 = vpack.c.b16 %v1790, %v1789
        %v1803 = vpack.c.b16 %v1792, %v1791
        %v1804 = vpack.c.b16 %v1794, %v1793
        %v1805 = vpack.c.b16 %v1796, %v1795
        %v1806 = vpack.c.b16 %v1798, %v1797
        %v1823 = vunpack.c.l.b16 %v1743
        %v1824 = vunpack.c.l.b16 %v1744
        %v1825 = vunpack.c.l.b16 %v1745
        %v1826 = vunpack.c.l.b16 %v1746
        %v1827 = vunpack.c.l.b16 %v1747
        %v1828 = vunpack.c.l.b16 %v1748
        %v1829 = vunpack.c.l.b16 %v1749
        %v1830 = vunpack.c.l.b16 %v1750
        %v1831 = vpack.c.b16 %v1823, %v1784
        %v1832 = vpack.c.b16 %v1824, %v1786
        %v1833 = vpack.c.b16 %v1825, %v1788
        %v1834 = vpack.c.b16 %v1826, %v1790
        %v1835 = vpack.c.b16 %v1827, %v1792
        %v1836 = vpack.c.b16 %v1828, %v1794
        %v1837 = vpack.c.b16 %v1829, %v1796
        %v1838 = vpack.c.b16 %v1830, %v1798
        %v1855 = vunpack.c.l.b16 %v1759
        %v1856 = vunpack.c.l.b16 %v1760
        %v1857 = vunpack.c.l.b16 %v1761
        %v1858 = vunpack.c.l.b16 %v1762
        %v1859 = vunpack.c.l.b16 %v1763
        %v1860 = vunpack.c.l.b16 %v1764
        %v1861 = vunpack.c.l.b16 %v1765
        %v1862 = vunpack.c.l.b16 %v1766
        %v1863 = vpack.c.b16 %v1855, %v1823
        %v1864 = vpack.c.b16 %v1856, %v1824
        %v1865 = vpack.c.b16 %v1857, %v1825
        %v1866 = vpack.c.b16 %v1858, %v1826
        %v1867 = vpack.c.b16 %v1859, %v1827
        %v1868 = vpack.c.b16 %v1860, %v1828
        %v1869 = vpack.c.b16 %v1861, %v1829
        %v1870 = vpack.c.b16 %v1862, %v1830
        %s1879 = scalar_lea.vmem [#allocation3], 384
        %v1880 = vld [vmem:[%s1879] sm:$0xf]
        %v1881 = vld [vmem:[%s1879 + $0x4] sm:$0xf]
        %v1882 = vld [vmem:[%s1879 + $0x8] sm:$0xf]
        %v1883 = vld [vmem:[%s1879 + $0xc] sm:$0xf]
        %v1884 = vld [vmem:[%s1879 + $0x10] sm:$0xf]
        %v1885 = vld [vmem:[%s1879 + $0x14] sm:$0xf]
        %v1886 = vld [vmem:[%s1879 + $0x18] sm:$0xf]
        %v1887 = vld [vmem:[%s1879 + $0x1c] sm:$0xf]
        %v1888 = vld [vmem:[%s1879 + $0x20] sm:$0xf]
        %v1889 = vld [vmem:[%s1879 + $0x24] sm:$0xf]
        %v1890 = vld [vmem:[%s1879 + $0x28] sm:$0xf]
        %v1891 = vld [vmem:[%s1879 + $0x2c] sm:$0xf]
        %v1892 = vld [vmem:[%s1879 + $0x30] sm:$0xf]
        %v1893 = vld [vmem:[%s1879 + $0x34] sm:$0xf]
        %v1894 = vld [vmem:[%s1879 + $0x38] sm:$0xf]
        %v1895 = vld [vmem:[%s1879 + $0x3c] sm:$0xf]
        %v1896 = vld [vmem:[%s1879 + $0x40] sm:$0xf]
        %v1897 = vld [vmem:[%s1879 + $0x44] sm:$0xf]
        %v1898 = vld [vmem:[%s1879 + $0x48] sm:$0xf]
        %v1899 = vld [vmem:[%s1879 + $0x4c] sm:$0xf]
        %v1900 = vld [vmem:[%s1879 + $0x50] sm:$0xf]
        %v1901 = vld [vmem:[%s1879 + $0x54] sm:$0xf]
        %v1902 = vld [vmem:[%s1879 + $0x58] sm:$0xf]
        %v1903 = vld [vmem:[%s1879 + $0x5c] sm:$0xf]
        %v1904 = vld [vmem:[%s1879 + $0x60] sm:$0xf]
        %v1905 = vld [vmem:[%s1879 + $0x64] sm:$0xf]
        %v1906 = vld [vmem:[%s1879 + $0x68] sm:$0xf]
        %v1907 = vld [vmem:[%s1879 + $0x6c] sm:$0xf]
        %v1908 = vld [vmem:[%s1879 + $0x70] sm:$0xf]
        %v1909 = vld [vmem:[%s1879 + $0x74] sm:$0xf]
        %v1910 = vld [vmem:[%s1879 + $0x78] sm:$0xf]
        %v1911 = vld [vmem:[%s1879 + $0x7c] sm:$0xf]
        %v1912 = vld [vmem:[%s1879 + $0x80] sm:$0xf]
        %v1913 = vld [vmem:[%s1879 + $0x84] sm:$0xf]
        %v1914 = vld [vmem:[%s1879 + $0x88] sm:$0xf]
        %v1915 = vld [vmem:[%s1879 + $0x8c] sm:$0xf]
        %v1916 = vld [vmem:[%s1879 + $0x90] sm:$0xf]
        %v1917 = vld [vmem:[%s1879 + $0x94] sm:$0xf]
        %v1918 = vld [vmem:[%s1879 + $0x98] sm:$0xf]
        %v1919 = vld [vmem:[%s1879 + $0x9c] sm:$0xf]
        %v1920 = vld [vmem:[%s1879 + $0xa0] sm:$0xf]
        %v1921 = vld [vmem:[%s1879 + $0xa4] sm:$0xf]
        %v1922 = vld [vmem:[%s1879 + $0xa8] sm:$0xf]
        %v1923 = vld [vmem:[%s1879 + $0xac] sm:$0xf]
        %v1924 = vld [vmem:[%s1879 + $0xb0] sm:$0xf]
        %v1925 = vld [vmem:[%s1879 + $0xb4] sm:$0xf]
        %v1926 = vld [vmem:[%s1879 + $0xb8] sm:$0xf]
        %v1927 = vld [vmem:[%s1879 + $0xbc] sm:$0xf]
        %v1976 = vunpack.c.l.b16 %v1880
        %v1977 = vunpack.c.l.b16 %v1881
        %v1978 = vunpack.c.l.b16 %v1882
        %v1979 = vunpack.c.l.b16 %v1883
        %v1980 = vunpack.c.l.b16 %v1884
        %v1981 = vunpack.c.l.b16 %v1885
        %v1982 = vunpack.c.l.b16 %v1886
        %v1983 = vunpack.c.l.b16 %v1887
        %v1984 = vunpack.c.l.b16 %v1888
        %v1985 = vunpack.c.l.b16 %v1889
        %v1986 = vunpack.c.l.b16 %v1890
        %v1987 = vunpack.c.l.b16 %v1891
        %v1988 = vunpack.c.l.b16 %v1892
        %v1989 = vunpack.c.l.b16 %v1893
        %v1990 = vunpack.c.l.b16 %v1894
        %v1991 = vunpack.c.l.b16 %v1895
        %v1992 = vunpack.c.l.b16 %v1896
        %v1993 = vunpack.c.l.b16 %v1897
        %v1994 = vunpack.c.l.b16 %v1898
        %v1995 = vunpack.c.l.b16 %v1899
        %v1996 = vunpack.c.l.b16 %v1900
        %v1997 = vunpack.c.l.b16 %v1901
        %v1998 = vunpack.c.l.b16 %v1902
        %v1999 = vunpack.c.l.b16 %v1903
        %v2000 = vunpack.c.l.b16 %v1904
        %v2001 = vunpack.c.l.b16 %v1905
        %v2002 = vunpack.c.l.b16 %v1906
        %v2003 = vunpack.c.l.b16 %v1907
        %v2004 = vunpack.c.l.b16 %v1908
        %v2005 = vunpack.c.l.b16 %v1909
        %v2006 = vunpack.c.l.b16 %v1910
        %v2007 = vunpack.c.l.b16 %v1911
        %v2008 = vunpack.c.l.b16 %v1912
        %v2009 = vunpack.c.l.b16 %v1913
        %v2010 = vunpack.c.l.b16 %v1914
        %v2011 = vunpack.c.l.b16 %v1915
        %v2012 = vunpack.c.l.b16 %v1916
        %v2013 = vunpack.c.l.b16 %v1917
        %v2014 = vunpack.c.l.b16 %v1918
        %v2015 = vunpack.c.l.b16 %v1919
        %v2016 = vunpack.c.l.b16 %v1920
        %v2017 = vunpack.c.l.b16 %v1921
        %v2018 = vunpack.c.l.b16 %v1922
        %v2019 = vunpack.c.l.b16 %v1923
        %v2020 = vunpack.c.l.b16 %v1924
        %v2021 = vunpack.c.l.b16 %v1925
        %v2022 = vunpack.c.l.b16 %v1926
        %v2023 = vunpack.c.l.b16 %v1927
        %v2024 = vpack.c.b16 %v1977, %v1976
        %v2025 = vpack.c.b16 %v1979, %v1978
        %v2026 = vpack.c.b16 %v1981, %v1980
        %v2027 = vpack.c.b16 %v1983, %v1982
        %v2028 = vpack.c.b16 %v1985, %v1984
        %v2029 = vpack.c.b16 %v1987, %v1986
        %v2030 = vpack.c.b16 %v1989, %v1988
        %v2031 = vpack.c.b16 %v1991, %v1990
        %v2032 = vpack.c.b16 %v1993, %v1992
        %v2033 = vpack.c.b16 %v1995, %v1994
        %v2034 = vpack.c.b16 %v1997, %v1996
        %v2035 = vpack.c.b16 %v1999, %v1998
        %v2036 = vpack.c.b16 %v2001, %v2000
        %v2037 = vpack.c.b16 %v2003, %v2002
        %v2038 = vpack.c.b16 %v2005, %v2004
        %v2039 = vpack.c.b16 %v2007, %v2006
        %v2040 = vpack.c.b16 %v2009, %v2008
        %v2041 = vpack.c.b16 %v2011, %v2010
        %v2042 = vpack.c.b16 %v2013, %v2012
        %v2043 = vpack.c.b16 %v2015, %v2014
        %v2044 = vpack.c.b16 %v2017, %v2016
        %v2045 = vpack.c.b16 %v2019, %v2018
        %v2046 = vpack.c.b16 %v2021, %v2020
        %v2047 = vpack.c.b16 %v2023, %v2022
        %2072 = vmatpush.bf16.msra.mxu0 %v2031
        %2073 = vmatpush.bf16.msra.mxu0 %v2030
        %2074 = vmatpush.bf16.msra.mxu0 %v2029
        %2075 = vmatpush.bf16.msra.mxu0 %v2028
        %2076 = vmatpush.bf16.msra.mxu0 %v2027
        %2077 = vmatpush.bf16.msra.mxu0 %v2026
        %2078 = vmatpush.bf16.msra.mxu0 %v2025
        %2079 = vmatpush.bf16.msra.mxu0 %v2024
        %2080 = vmatmul.bf16.gmra.mxu0 %v1799
        %v2081 = vpop.f32.mrf.mxu0
        %v2082 = vadd.f32 0.0, %v2081
        %v2083 = vpop.f32.mrf.mxu0
        %v2084 = vadd.f32 0.0, %v2083
        %2085 = vmatmul.bf16.gmra.mxu0 %v1800
        %v2086 = vpop.f32.mrf.mxu0
        %v2087 = vadd.f32 0.0, %v2086
        %v2088 = vpop.f32.mrf.mxu0
        %v2089 = vadd.f32 0.0, %v2088
        %2090 = vmatmul.bf16.gmra.mxu0 %v1801
        %v2091 = vpop.f32.mrf.mxu0
        %v2092 = vadd.f32 0.0, %v2091
        %v2093 = vpop.f32.mrf.mxu0
        %v2094 = vadd.f32 0.0, %v2093
        %2095 = vmatmul.bf16.gmra.mxu0 %v1802
        %v2096 = vpop.f32.mrf.mxu0
        %v2097 = vadd.f32 0.0, %v2096
        %v2098 = vpop.f32.mrf.mxu0
        %v2099 = vadd.f32 0.0, %v2098
        %2100 = vmatmul.bf16.gmra.mxu0 %v1803
        %v2101 = vpop.f32.mrf.mxu0
        %v2102 = vadd.f32 0.0, %v2101
        %v2103 = vpop.f32.mrf.mxu0
        %v2104 = vadd.f32 0.0, %v2103
        %2105 = vmatmul.bf16.gmra.mxu0 %v1804
        %v2106 = vpop.f32.mrf.mxu0
        %v2107 = vadd.f32 0.0, %v2106
        %v2108 = vpop.f32.mrf.mxu0
        %v2109 = vadd.f32 0.0, %v2108
        %2110 = vmatmul.bf16.gmra.mxu0 %v1805
        %v2111 = vpop.f32.mrf.mxu0
        %v2112 = vadd.f32 0.0, %v2111
        %v2113 = vpop.f32.mrf.mxu0
        %v2114 = vadd.f32 0.0, %v2113
        %2115 = vmatmul.bf16.gmra.mxu0 %v1806
        %v2116 = vpop.f32.mrf.mxu0
        %v2117 = vadd.f32 0.0, %v2116
        %v2118 = vpop.f32.mrf.mxu0
        %v2119 = vadd.f32 0.0, %v2118
        %2120 = vdwg.mxu0
        %2121 = vmatpush.bf16.msra.mxu0 %v2039
        %2122 = vmatpush.bf16.msra.mxu0 %v2038
        %2123 = vmatpush.bf16.msra.mxu0 %v2037
        %2124 = vmatpush.bf16.msra.mxu0 %v2036
        %2125 = vmatpush.bf16.msra.mxu0 %v2035
        %2126 = vmatpush.bf16.msra.mxu0 %v2034
        %2127 = vmatpush.bf16.msra.mxu0 %v2033
        %2128 = vmatpush.bf16.msra.mxu0 %v2032
        %2129 = vmatmul.bf16.gmra.mxu0 %v1831
        %v2130 = vpop.f32.mrf.mxu0
        %v2131 = vadd.f32 %v2082, %v2130
        %v2132 = vpop.f32.mrf.mxu0
        %v2133 = vadd.f32 %v2084, %v2132
        %2134 = vmatmul.bf16.gmra.mxu0 %v1832
        %v2135 = vpop.f32.mrf.mxu0
        %v2136 = vadd.f32 %v2087, %v2135
        %v2137 = vpop.f32.mrf.mxu0
        %v2138 = vadd.f32 %v2089, %v2137
        %2139 = vmatmul.bf16.gmra.mxu0 %v1833
        %v2140 = vpop.f32.mrf.mxu0
        %v2141 = vadd.f32 %v2092, %v2140
        %v2142 = vpop.f32.mrf.mxu0
        %v2143 = vadd.f32 %v2094, %v2142
        %2144 = vmatmul.bf16.gmra.mxu0 %v1834
        %v2145 = vpop.f32.mrf.mxu0
        %v2146 = vadd.f32 %v2097, %v2145
        %v2147 = vpop.f32.mrf.mxu0
        %v2148 = vadd.f32 %v2099, %v2147
        %2149 = vmatmul.bf16.gmra.mxu0 %v1835
        %v2150 = vpop.f32.mrf.mxu0
        %v2151 = vadd.f32 %v2102, %v2150
        %v2152 = vpop.f32.mrf.mxu0
        %v2153 = vadd.f32 %v2104, %v2152
        %2154 = vmatmul.bf16.gmra.mxu0 %v1836
        %v2155 = vpop.f32.mrf.mxu0
        %v2156 = vadd.f32 %v2107, %v2155
        %v2157 = vpop.f32.mrf.mxu0
        %v2158 = vadd.f32 %v2109, %v2157
        %2159 = vmatmul.bf16.gmra.mxu0 %v1837
        %v2160 = vpop.f32.mrf.mxu0
        %v2161 = vadd.f32 %v2112, %v2160
        %v2162 = vpop.f32.mrf.mxu0
        %v2163 = vadd.f32 %v2114, %v2162
        %2164 = vmatmul.bf16.gmra.mxu0 %v1838
        %v2165 = vpop.f32.mrf.mxu0
        %v2166 = vadd.f32 %v2117, %v2165
        %v2167 = vpop.f32.mrf.mxu0
        %v2168 = vadd.f32 %v2119, %v2167
        %2169 = vdwg.mxu0
        %2170 = vmatpush.bf16.msra.mxu0 %v2047
        %2171 = vmatpush.bf16.msra.mxu0 %v2046
        %2172 = vmatpush.bf16.msra.mxu0 %v2045
        %2173 = vmatpush.bf16.msra.mxu0 %v2044
        %2174 = vmatpush.bf16.msra.mxu0 %v2043
        %2175 = vmatpush.bf16.msra.mxu0 %v2042
        %2176 = vmatpush.bf16.msra.mxu0 %v2041
        %2177 = vmatpush.bf16.msra.mxu0 %v2040
        %2178 = vmatmul.bf16.gmra.mxu0 %v1863
        %v2179 = vpop.f32.mrf.mxu0
        %v2180 = vadd.f32 %v2131, %v2179
        %v2181 = vpop.f32.mrf.mxu0
        %v2182 = vadd.f32 %v2133, %v2181
        %2183 = vmatmul.bf16.gmra.mxu0 %v1864
        %v2184 = vpop.f32.mrf.mxu0
        %v2185 = vadd.f32 %v2136, %v2184
        %v2186 = vpop.f32.mrf.mxu0
        %v2187 = vadd.f32 %v2138, %v2186
        %2188 = vmatmul.bf16.gmra.mxu0 %v1865
        %v2189 = vpop.f32.mrf.mxu0
        %v2190 = vadd.f32 %v2141, %v2189
        %v2191 = vpop.f32.mrf.mxu0
        %v2192 = vadd.f32 %v2143, %v2191
        %2193 = vmatmul.bf16.gmra.mxu0 %v1866
        %v2194 = vpop.f32.mrf.mxu0
        %v2195 = vadd.f32 %v2146, %v2194
        %v2196 = vpop.f32.mrf.mxu0
        %v2197 = vadd.f32 %v2148, %v2196
        %2198 = vmatmul.bf16.gmra.mxu0 %v1867
        %v2199 = vpop.f32.mrf.mxu0
        %v2200 = vadd.f32 %v2151, %v2199
        %v2201 = vpop.f32.mrf.mxu0
        %v2202 = vadd.f32 %v2153, %v2201
        %2203 = vmatmul.bf16.gmra.mxu0 %v1868
        %v2204 = vpop.f32.mrf.mxu0
        %v2205 = vadd.f32 %v2156, %v2204
        %v2206 = vpop.f32.mrf.mxu0
        %v2207 = vadd.f32 %v2158, %v2206
        %2208 = vmatmul.bf16.gmra.mxu0 %v1869
        %v2209 = vpop.f32.mrf.mxu0
        %v2210 = vadd.f32 %v2161, %v2209
        %v2211 = vpop.f32.mrf.mxu0
        %v2212 = vadd.f32 %v2163, %v2211
        %2213 = vmatmul.bf16.gmra.mxu0 %v1870
        %v2214 = vpop.f32.mrf.mxu0
        %v2215 = vadd.f32 %v2166, %v2214
        %v2216 = vpop.f32.mrf.mxu0
        %v2217 = vadd.f32 %v2168, %v2216
        %2218 = vdwg.mxu0
        %v2219 = vadd.f32 %v1661, %v2180
        %v2220 = vadd.f32 %v1663, %v2182
        %v2221 = vadd.f32 %v1666, %v2185
        %v2222 = vadd.f32 %v1668, %v2187
        %v2223 = vadd.f32 %v1671, %v2190
        %v2224 = vadd.f32 %v1673, %v2192
        %v2225 = vadd.f32 %v1676, %v2195
        %v2226 = vadd.f32 %v1678, %v2197
        %v2227 = vadd.f32 %v1681, %v2200
        %v2228 = vadd.f32 %v1683, %v2202
        %v2229 = vadd.f32 %v1686, %v2205
        %v2230 = vadd.f32 %v1688, %v2207
        %v2231 = vadd.f32 %v1691, %v2210
        %v2232 = vadd.f32 %v1693, %v2212
        %v2233 = vadd.f32 %v1696, %v2215
        %v2234 = vadd.f32 %v1698, %v2217
        %v2236 = vperm.slane %v661, 0
        %v2238 = vmul.f32 %v2219, %v2236
        %v2239 = vmul.f32 %v2220, %v2236
        %v2240 = vmul.f32 %v2221, %v2236
        %v2241 = vmul.f32 %v2222, %v2236
        %v2242 = vmul.f32 %v2223, %v2236
        %v2243 = vmul.f32 %v2224, %v2236
        %v2244 = vmul.f32 %v2225, %v2236
        %v2245 = vmul.f32 %v2226, %v2236
        %v2246 = vmul.f32 %v2227, %v2236
        %v2247 = vmul.f32 %v2228, %v2236
        %v2248 = vmul.f32 %v2229, %v2236
        %v2249 = vmul.f32 %v2230, %v2236
        %v2250 = vmul.f32 %v2231, %v2236
        %v2251 = vmul.f32 %v2232, %v2236
        %v2252 = vmul.f32 %v2233, %v2236
        %v2253 = vmul.f32 %v2234, %v2236
        %v2255 = vperm.slane %v662, 0
        %v2257 = vadd.f32 %v2238, %v2255
        %v2258 = vadd.f32 %v2239, %v2255
        %v2259 = vadd.f32 %v2240, %v2255
        %v2260 = vadd.f32 %v2241, %v2255
        %v2261 = vadd.f32 %v2242, %v2255
        %v2262 = vadd.f32 %v2243, %v2255
        %v2263 = vadd.f32 %v2244, %v2255
        %v2264 = vadd.f32 %v2245, %v2255
        %v2265 = vadd.f32 %v2246, %v2255
        %v2266 = vadd.f32 %v2247, %v2255
        %v2267 = vadd.f32 %v2248, %v2255
        %v2268 = vadd.f32 %v2249, %v2255
        %v2269 = vadd.f32 %v2250, %v2255
        %v2270 = vadd.f32 %v2251, %v2255
        %v2271 = vadd.f32 %v2252, %v2255
        %v2272 = vadd.f32 %v2253, %v2255
        %v2273 = vmax.f32 %v2257, 0.0
        %v2274 = vmax.f32 %v2258, 0.0
        %v2275 = vmax.f32 %v2259, 0.0
        %v2276 = vmax.f32 %v2260, 0.0
        %v2277 = vmax.f32 %v2261, 0.0
        %v2278 = vmax.f32 %v2262, 0.0
        %v2279 = vmax.f32 %v2263, 0.0
        %v2280 = vmax.f32 %v2264, 0.0
        %v2281 = vmax.f32 %v2265, 0.0
        %v2282 = vmax.f32 %v2266, 0.0
        %v2283 = vmax.f32 %v2267, 0.0
        %v2284 = vmax.f32 %v2268, 0.0
        %v2285 = vmax.f32 %v2269, 0.0
        %v2286 = vmax.f32 %v2270, 0.0
        %v2287 = vmax.f32 %v2271, 0.0
        %v2288 = vmax.f32 %v2272, 0.0
        %2289 = vst [vmem:[%s302] sm:$0xff] %v2273
        %2290 = vst [vmem:[%s302 + $0x8] sm:$0xff] %v2274
        %2291 = vst [vmem:[%s302 + $0x10] sm:$0xff] %v2275
        %2292 = vst [vmem:[%s302 + $0x18] sm:$0xff] %v2276
        %2293 = vst [vmem:[%s302 + $0x20] sm:$0xff] %v2277
        %2294 = vst [vmem:[%s302 + $0x28] sm:$0xff] %v2278
        %2295 = vst [vmem:[%s302 + $0x30] sm:$0xff] %v2279
        %2296 = vst [vmem:[%s302 + $0x38] sm:$0xff] %v2280
        %2297 = vst [vmem:[%s302 + $0x40] sm:$0xff] %v2281
        %2298 = vst [vmem:[%s302 + $0x48] sm:$0xff] %v2282
        %2299 = vst [vmem:[%s302 + $0x50] sm:$0xff] %v2283
        %2300 = vst [vmem:[%s302 + $0x58] sm:$0xff] %v2284
        %2301 = vst [vmem:[%s302 + $0x60] sm:$0xff] %v2285
        %2302 = vst [vmem:[%s302 + $0x68] sm:$0xff] %v2286
        %2303 = vst [vmem:[%s302 + $0x70] sm:$0xff] %v2287
        %2304 = vst [vmem:[%s302 + $0x78] sm:$0xff] %v2288
        %s2305 = sand.u32 %s196, 1
        %s2306 = scalar_lea.sflag [#allocation5], %s2305
        %s2307 = sand.u32 %s196, 1
        %s2308 = smul.addr %s2307, 128
        %s2309 = scalar_lea.vmem [#allocation6], %s2308
        // Predicated region
        $region64: #{tpu_custom_call.1} parent=47 // pred_check
          %p2310 = pneg %p206
        $region65: #{tpu_custom_call.1} parent=47 // pred_check_branch
          %2312 = sbr.rel (%p2310) target = $region67
        $region66: #{tpu_custom_call.1} parent=47 // pred_region
          %s2313 = smul.u32 16, %s27
          %2315 = vsyncadd %s2306, 0
          %s2316 = smul.addr %s26, 32
          %s2317 = sadd.s32 %s2313, %s2316
          %s2318 = smul.addr %s2317, 8
          %s2319 = scalar_lea.hbm %s7, %s2318
          %s2320 = sshll.u32 %s2309, 4
          %s2321 = int_to_ptr.vmem [resolvable:$true] %s2320
          %s2322 = sshll.u32 %s2319, 4
          %s2323 = int_to_ptr.hbm [resolvable:$true] %s2322
          %2328 = dma.vmem_to_hbm [thread:$0]  %s2321, 2048, %s2323, %s2306, 128, 128, 8
        $region67: #{tpu_custom_call.1} parent=47 // pred_fallthru
          _
      $region48: #{tpu_custom_call.1} parent=5 // pred_fallthru
        _
      %p2329 = scmp.le.s32.totalorder 2, %s17
      // Predicated region
      $region68: #{tpu_custom_call.1} parent=5 // pred_check
        %p2330 = pneg %p2329
      $region69: #{tpu_custom_call.1} parent=5 // pred_check_branch
        %2332 = sbr.rel (%p2330) target = $region71
      $region70: #{tpu_custom_call.1} parent=5 // pred_region
        %s2333 = ssub.s32 %s17, 2
        // Predicated region
        $region72: #{tpu_custom_call.1} parent=70 // pred_check
          %p2334 = pneg %p212
        $region73: #{tpu_custom_call.1} parent=70 // pred_check_branch
          %2336 = sbr.rel (%p2334) target = $region75
        $region74: #{tpu_custom_call.1} parent=70 // pred_region
          %s2337 = sand.u32 %s197, 1
          %s2338 = scalar_lea.sflag [#allocation5], %s2337
          %s2339 = sand.u32 %s197, 1
          %s2340 = smul.addr %s2339, 128
          %s2341 = scalar_lea.vmem [#allocation6], %s2340
          %2343 = dma.done %s2338, 2048
        $region75: #{tpu_custom_call.1} parent=70 // pred_fallthru
          _
      $region71: #{tpu_custom_call.1} parent=5 // pred_fallthru
        _
    $region6: #{tpu_custom_call.1} parent=1 // loop_footer
      %s21 = sadd.s32 1, %s17
    $region7: #{tpu_custom_call.1} parent=1 // loop_footer_branch
      %16 = sbr.rel target = $region3
    $region8: #{tpu_custom_call.1} parent=1 // loop_exit
      _
    %2344 = vsyncpa [#allocation4], 1
    %s2345 = scalar_lea.sflag [#allocation4], 1
    %2346 = vsyncpa %s2345, 1
    %2347 = vsyncpa [#allocation5], 1
    %s2348 = scalar_lea.sflag [#allocation5], 1
    %2349 = vsyncpa %s2348, 1

</llo_original>
